<compile_context>
chip_gen: v5e
topology: v5e:2x2
jax: 0.10.0
libtpu: 0.0.40
codegen_flags: <defaults>
</compile_context>

<pallas_src>
import numpy as np
import jax
import jax.numpy as jnp
from jax.experimental import pallas as pl
from jax.experimental.pallas import tpu as pltpu


def _entmax15_kernel(x_ref, o_ref):
    # Block layout: (D, TR) — entmax axis D on sublanes, TR independent rows
    # on the lane axis (lane-dense loads/stores, full vreg occupancy).
    x = x_ref[...].astype(jnp.float32)                   # (D, TR)
    D = x.shape[0]

    m = jnp.max(x, axis=0, keepdims=True)                # (1, TR)
    z = (x - m) * 0.5                                     # shift + alpha=1.5 scaling

    k_best = jnp.zeros_like(m)                            # largest valid support size so far
    tau_best = jnp.zeros_like(m)                          # tau at that support size

    # Sort-free exact threshold, one candidate per (fully unrolled, static)
    # iteration.  For candidate i, the count / sum / sum-of-squares of all
    # elements >= z[i] equal the cumulative statistics at that element's
    # position in the descending sort.
    for i in range(D):
        zi = z[i:i + 1, :]                                # (1, TR) candidate value (static slice)
        ge = z >= zi                                      # (D, TR) mask
        sel = jnp.where(ge, z, 0.0)                       # NaN-safe masked values (-inf inputs ok)
        cnt = jnp.sum(jnp.where(ge, 1.0, 0.0), axis=0, keepdims=True)  # rho at this position
        s1 = jnp.sum(sel, axis=0, keepdims=True)
        s2 = jnp.sum(sel * sel, axis=0, keepdims=True)

        inv_cnt = 1.0 / cnt                               # cnt >= 1 (candidate counts itself); exact
        mean = s1 * inv_cnt
        mean_sq = s2 * inv_cnt
        ss = cnt * (mean_sq - mean * mean)
        delta = (1.0 - ss) * inv_cnt
        tau = mean - jnp.sqrt(jnp.maximum(delta, 0.0))

        # Support condition: tau(k) <= k-th largest value (== the candidate).
        # Keep the valid candidate with the largest support (cnt is an exact
        # small-integer-valued f32, so the > comparison is exact).
        better = jnp.logical_and(tau <= zi, cnt > k_best)
        tau_best = jnp.where(better, tau, tau_best)
        k_best = jnp.where(better, cnt, k_best)

    y = jnp.maximum(z - tau_best, 0.0)
    o_ref[...] = (y * y).astype(o_ref.dtype)


def _choose_lane_tile(R, D):
    """Lane-axis tile size: biggest power-of-two multiple of 128 that keeps
    ~6 live (D, TR) f32 temporaries within ~3/4 of the 64 x 4 KiB vreg file,
    while leaving >= 2 grid steps so v7x megacore can shard the parallel axis."""
    LANE = 128
    VREG_BYTES = 4096
    budget_bytes = 48 * VREG_BYTES
    live_temps = 6
    tr = budget_bytes // (live_temps * 4 * max(D, 1))
    tr = max(LANE, min(2048, tr))
    p = LANE
    while p * 2 <= tr:
        p *= 2
    tr = p
    while tr > LANE and (R + tr - 1) // tr < 2:
        tr //= 2
    return tr


def entmax15(x, dim=-1):
    """Entmax15 activation along `dim`, computed with a Pallas TPU kernel."""
    dim = dim % x.ndim

    # Put the entmax axis first (sublanes) and flatten everything else onto
    # the lane axis.  One small XLA transpose each way buys an 8x denser lane
    # layout inside the kernel (the dominant lever for small D).
    # TODO(synk): for dim != -1 the permutation could be folded into the
    # BlockSpec index_map to avoid one of the HBM copies.
    xt = jnp.moveaxis(x, dim, 0)
    D = xt.shape[0]
    lead_shape = xt.shape[1:]
    R = int(np.prod(lead_shape)) if lead_shape else 1
    x2 = xt.reshape(D, R)

    TR = _choose_lane_tile(R, D)
    R_pad = ((R + TR - 1) // TR) * TR
    if R_pad != R:
        x2 = jnp.pad(x2, ((0, 0), (0, R_pad - R)))
    grid = (R_pad // TR,)

    # Per-generation-safe VMEM budget: blocks are tiny, so a few MiB with
    # headroom (well under v7x's 32 MiB scoped / 64 MiB physical VMEM).
    block_bytes = D * TR * np.dtype(x.dtype).itemsize
    vmem_limit = int(min(32 << 20, max(4 << 20, 16 * block_bytes)))

    out = pl.pallas_call(
        _entmax15_kernel,
        out_shape=jax.ShapeDtypeStruct((D, R_pad), x.dtype),
        grid_spec=pltpu.PrefetchScalarGridSpec(
            num_scalar_prefetch=0,
            grid=grid,
            in_specs=[pl.BlockSpec((D, TR), lambda i: (0, i))],
            out_specs=pl.BlockSpec((D, TR), lambda i: (0, i)),
        ),
        compiler_params=pltpu.CompilerParams(
            dimension_semantics=("parallel",),
            vmem_limit_bytes=vmem_limit,
        ),
    )(x2)

    out = out[:, :R].reshape((D,) + lead_shape)
    return jnp.moveaxis(out, 0, dim)


def _entmax15_ref(x, dim=-1):
    """Pure-JAX reference mirroring the PyTorch Entmax15Function forward."""
    x = jnp.moveaxis(x, dim, -1)
    m = jnp.max(x, axis=-1, keepdims=True)
    z = (x - m) / 2
    zs = -jnp.sort(-z, axis=-1)                           # descending sort
    D = z.shape[-1]
    rho = jnp.arange(1, D + 1, dtype=z.dtype)
    mean = jnp.cumsum(zs, axis=-1) / rho
    mean_sq = jnp.cumsum(zs * zs, axis=-1) / rho
    ss = rho * (mean_sq - mean ** 2)
    delta = (1 - ss) / rho
    tau = mean - jnp.sqrt(jnp.clip(delta, 0))
    support = jnp.sum((tau <= zs).astype(jnp.int32), axis=-1, keepdims=True)
    tau_star = jnp.take_along_axis(tau, support - 1, axis=-1)
    out = jnp.clip(z - tau_star, 0) ** 2
    return jnp.moveaxis(out, -1, dim)


if __name__ == "__main__":
    key = jax.random.PRNGKey(0)
    # NCHW input, entmax applied along the last axis (module default dim=-1).
    x = jax.random.normal(key, (2, 4, 16, 16), dtype=jnp.float32)

    y = entmax15(x, dim=-1)
    y = jax.block_until_ready(y)

    y_ref = _entmax15_ref(x, dim=-1)
    assert y.shape == x.shape and y.dtype == x.dtype
    np.testing.assert_allclose(np.asarray(y), np.asarray(y_ref), atol=1e-5, rtol=1e-5)
    # Entmax rows form a (sparse) probability distribution.
    np.testing.assert_allclose(np.asarray(jnp.sum(y, axis=-1)), 1.0, atol=1e-4)

    print("KERNEL_OK")
</pallas_src>

<mosaic_0001>
module attributes {stable_mosaic.version = 11 : i64} {
  func.func @_entmax15_kernel(%arg0: i32, %arg1: memref<16x128xf32, #tpu.memory_space<vmem>>, %arg2: memref<16x128xf32, #tpu.memory_space<vmem>>) attributes {dimension_semantics = [#tpu.dimension_semantics<parallel>], iteration_bounds = array<i64: 1>, scalar_prefetch = 0 : i64, scratch_operands = 0 : i64, tpu.core_type = #tpu.core_type<tc>, window_params = [{transform_indices = @transform_0, window_bounds = array<i64: 16, 128>}, {transform_indices = @transform_1, window_bounds = array<i64: 16, 128>}]} {
    %c0 = arith.constant 0 : index
    %c0_0 = arith.constant 0 : index
    %0 = vector.load %arg1[%c0, %c0_0] : memref<16x128xf32, #tpu.memory_space<vmem>>, vector<16x128xf32>
    %cst = arith.constant dense<0xFF800000> : vector<128xf32>
    %1 = vector.multi_reduction <maximumf>, %0, %cst [0] : vector<16x128xf32> to vector<128xf32>
    %2 = vector.shape_cast %1 : vector<128xf32> to vector<1x128xf32>
    %3 = vector.broadcast %2 : vector<1x128xf32> to vector<16x128xf32>
    %4 = arith.subf %0, %3 : vector<16x128xf32>
    %cst_1 = arith.constant 5.000000e-01 : f32
    %5 = vector.broadcast %cst_1 : f32 to vector<16x128xf32>
    %6 = arith.mulf %4, %5 : vector<16x128xf32>
    %cst_2 = arith.constant 0.000000e+00 : f32
    %7 = vector.broadcast %cst_2 : f32 to vector<1x128xf32>
    %cst_3 = arith.constant 0.000000e+00 : f32
    %8 = vector.broadcast %cst_3 : f32 to vector<1x128xf32>
    %9 = vector.extract_strided_slice %6 {offsets = [0, 0], sizes = [1, 128], strides = [1, 1]} : vector<16x128xf32> to vector<1x128xf32>
    %10 = vector.broadcast %9 : vector<1x128xf32> to vector<16x128xf32>
    %11 = arith.cmpf oge, %6, %10 : vector<16x128xf32>
    %cst_4 = arith.constant 0.000000e+00 : f32
    %12 = vector.broadcast %cst_4 : f32 to vector<16x128xf32>
    %13 = arith.select %11, %6, %12 : vector<16x128xi1>, vector<16x128xf32>
    %cst_5 = arith.constant 1.000000e+00 : f32
    %cst_6 = arith.constant 0.000000e+00 : f32
    %14 = vector.broadcast %cst_5 : f32 to vector<16x128xf32>
    %15 = vector.broadcast %cst_6 : f32 to vector<16x128xf32>
    %16 = arith.select %11, %14, %15 : vector<16x128xi1>, vector<16x128xf32>
    %cst_7 = arith.constant dense<0.000000e+00> : vector<128xf32>
    %17 = vector.multi_reduction <add>, %16, %cst_7 [0] : vector<16x128xf32> to vector<128xf32>
    %18 = vector.shape_cast %17 : vector<128xf32> to vector<1x128xf32>
    %cst_8 = arith.constant dense<0.000000e+00> : vector<128xf32>
    %19 = vector.multi_reduction <add>, %13, %cst_8 [0] : vector<16x128xf32> to vector<128xf32>
    %20 = vector.shape_cast %19 : vector<128xf32> to vector<1x128xf32>
    %21 = arith.mulf %13, %13 : vector<16x128xf32>
    %cst_9 = arith.constant dense<0.000000e+00> : vector<128xf32>
    %22 = vector.multi_reduction <add>, %21, %cst_9 [0] : vector<16x128xf32> to vector<128xf32>
    %23 = vector.shape_cast %22 : vector<128xf32> to vector<1x128xf32>
    %cst_10 = arith.constant 1.000000e+00 : f32
    %24 = vector.broadcast %cst_10 : f32 to vector<1x128xf32>
    %25 = arith.divf %24, %18 : vector<1x128xf32>
    %26 = arith.mulf %20, %25 : vector<1x128xf32>
    %27 = arith.mulf %23, %25 : vector<1x128xf32>
    %28 = arith.mulf %26, %26 : vector<1x128xf32>
    %29 = arith.subf %27, %28 : vector<1x128xf32>
    %30 = arith.mulf %18, %29 : vector<1x128xf32>
    %cst_11 = arith.constant 1.000000e+00 : f32
    %31 = vector.broadcast %cst_11 : f32 to vector<1x128xf32>
    %32 = arith.subf %31, %30 : vector<1x128xf32>
    %33 = arith.mulf %32, %25 : vector<1x128xf32>
    %cst_12 = arith.constant 0.000000e+00 : f32
    %34 = vector.broadcast %cst_12 : f32 to vector<1x128xf32>
    %35 = arith.maximumf %33, %34 : vector<1x128xf32>
    %36 = math.sqrt %35 : vector<1x128xf32>
    %37 = arith.subf %26, %36 : vector<1x128xf32>
    %38 = arith.cmpf ole, %37, %9 : vector<1x128xf32>
    %39 = arith.cmpf ogt, %18, %7 : vector<1x128xf32>
    %40 = arith.andi %38, %39 : vector<1x128xi1>
    %41 = arith.select %40, %37, %8 : vector<1x128xi1>, vector<1x128xf32>
    %42 = arith.select %40, %18, %7 : vector<1x128xi1>, vector<1x128xf32>
    %43 = vector.extract_strided_slice %6 {offsets = [1, 0], sizes = [1, 128], strides = [1, 1]} : vector<16x128xf32> to vector<1x128xf32>
    %44 = vector.broadcast %43 : vector<1x128xf32> to vector<16x128xf32>
    %45 = arith.cmpf oge, %6, %44 : vector<16x128xf32>
    %cst_13 = arith.constant 0.000000e+00 : f32
    %46 = vector.broadcast %cst_13 : f32 to vector<16x128xf32>
    %47 = arith.select %45, %6, %46 : vector<16x128xi1>, vector<16x128xf32>
    %cst_14 = arith.constant 1.000000e+00 : f32
    %cst_15 = arith.constant 0.000000e+00 : f32
    %48 = vector.broadcast %cst_14 : f32 to vector<16x128xf32>
    %49 = vector.broadcast %cst_15 : f32 to vector<16x128xf32>
    %50 = arith.select %45, %48, %49 : vector<16x128xi1>, vector<16x128xf32>
    %cst_16 = arith.constant dense<0.000000e+00> : vector<128xf32>
    %51 = vector.multi_reduction <add>, %50, %cst_16 [0] : vector<16x128xf32> to vector<128xf32>
    %52 = vector.shape_cast %51 : vector<128xf32> to vector<1x128xf32>
    %cst_17 = arith.constant dense<0.000000e+00> : vector<128xf32>
    %53 = vector.multi_reduction <add>, %47, %cst_17 [0] : vector<16x128xf32> to vector<128xf32>
    %54 = vector.shape_cast %53 : vector<128xf32> to vector<1x128xf32>
    %55 = arith.mulf %47, %47 : vector<16x128xf32>
    %cst_18 = arith.constant dense<0.000000e+00> : vector<128xf32>
    %56 = vector.multi_reduction <add>, %55, %cst_18 [0] : vector<16x128xf32> to vector<128xf32>
    %57 = vector.shape_cast %56 : vector<128xf32> to vector<1x128xf32>
    %cst_19 = arith.constant 1.000000e+00 : f32
    %58 = vector.broadcast %cst_19 : f32 to vector<1x128xf32>
    %59 = arith.divf %58, %52 : vector<1x128xf32>
    %60 = arith.mulf %54, %59 : vector<1x128xf32>
    %61 = arith.mulf %57, %59 : vector<1x128xf32>
    %62 = arith.mulf %60, %60 : vector<1x128xf32>
    %63 = arith.subf %61, %62 : vector<1x128xf32>
    %64 = arith.mulf %52, %63 : vector<1x128xf32>
    %cst_20 = arith.constant 1.000000e+00 : f32
    %65 = vector.broadcast %cst_20 : f32 to vector<1x128xf32>
    %66 = arith.subf %65, %64 : vector<1x128xf32>
    %67 = arith.mulf %66, %59 : vector<1x128xf32>
    %cst_21 = arith.constant 0.000000e+00 : f32
    %68 = vector.broadcast %cst_21 : f32 to vector<1x128xf32>
    %69 = arith.maximumf %67, %68 : vector<1x128xf32>
    %70 = math.sqrt %69 : vector<1x128xf32>
    %71 = arith.subf %60, %70 : vector<1x128xf32>
    %72 = arith.cmpf ole, %71, %43 : vector<1x128xf32>
    %73 = arith.cmpf ogt, %52, %42 : vector<1x128xf32>
    %74 = arith.andi %72, %73 : vector<1x128xi1>
    %75 = arith.select %74, %71, %41 : vector<1x128xi1>, vector<1x128xf32>
    %76 = arith.select %74, %52, %42 : vector<1x128xi1>, vector<1x128xf32>
    %77 = vector.extract_strided_slice %6 {offsets = [2, 0], sizes = [1, 128], strides = [1, 1]} : vector<16x128xf32> to vector<1x128xf32>
    %78 = vector.broadcast %77 : vector<1x128xf32> to vector<16x128xf32>
    %79 = arith.cmpf oge, %6, %78 : vector<16x128xf32>
    %cst_22 = arith.constant 0.000000e+00 : f32
    %80 = vector.broadcast %cst_22 : f32 to vector<16x128xf32>
    %81 = arith.select %79, %6, %80 : vector<16x128xi1>, vector<16x128xf32>
    %cst_23 = arith.constant 1.000000e+00 : f32
    %cst_24 = arith.constant 0.000000e+00 : f32
    %82 = vector.broadcast %cst_23 : f32 to vector<16x128xf32>
    %83 = vector.broadcast %cst_24 : f32 to vector<16x128xf32>
    %84 = arith.select %79, %82, %83 : vector<16x128xi1>, vector<16x128xf32>
    %cst_25 = arith.constant dense<0.000000e+00> : vector<128xf32>
    %85 = vector.multi_reduction <add>, %84, %cst_25 [0] : vector<16x128xf32> to vector<128xf32>
    %86 = vector.shape_cast %85 : vector<128xf32> to vector<1x128xf32>
    %cst_26 = arith.constant dense<0.000000e+00> : vector<128xf32>
    %87 = vector.multi_reduction <add>, %81, %cst_26 [0] : vector<16x128xf32> to vector<128xf32>
    %88 = vector.shape_cast %87 : vector<128xf32> to vector<1x128xf32>
    %89 = arith.mulf %81, %81 : vector<16x128xf32>
    %cst_27 = arith.constant dense<0.000000e+00> : vector<128xf32>
    %90 = vector.multi_reduction <add>, %89, %cst_27 [0] : vector<16x128xf32> to vector<128xf32>
    %91 = vector.shape_cast %90 : vector<128xf32> to vector<1x128xf32>
    %cst_28 = arith.constant 1.000000e+00 : f32
    %92 = vector.broadcast %cst_28 : f32 to vector<1x128xf32>
    %93 = arith.divf %92, %86 : vector<1x128xf32>
    %94 = arith.mulf %88, %93 : vector<1x128xf32>
    %95 = arith.mulf %91, %93 : vector<1x128xf32>
    %96 = arith.mulf %94, %94 : vector<1x128xf32>
    %97 = arith.subf %95, %96 : vector<1x128xf32>
    %98 = arith.mulf %86, %97 : vector<1x128xf32>
    %cst_29 = arith.constant 1.000000e+00 : f32
    %99 = vector.broadcast %cst_29 : f32 to vector<1x128xf32>
    %100 = arith.subf %99, %98 : vector<1x128xf32>
    %101 = arith.mulf %100, %93 : vector<1x128xf32>
    %cst_30 = arith.constant 0.000000e+00 : f32
    %102 = vector.broadcast %cst_30 : f32 to vector<1x128xf32>
    %103 = arith.maximumf %101, %102 : vector<1x128xf32>
    %104 = math.sqrt %103 : vector<1x128xf32>
    %105 = arith.subf %94, %104 : vector<1x128xf32>
    %106 = arith.cmpf ole, %105, %77 : vector<1x128xf32>
    %107 = arith.cmpf ogt, %86, %76 : vector<1x128xf32>
    %108 = arith.andi %106, %107 : vector<1x128xi1>
    %109 = arith.select %108, %105, %75 : vector<1x128xi1>, vector<1x128xf32>
    %110 = arith.select %108, %86, %76 : vector<1x128xi1>, vector<1x128xf32>
    %111 = vector.extract_strided_slice %6 {offsets = [3, 0], sizes = [1, 128], strides = [1, 1]} : vector<16x128xf32> to vector<1x128xf32>
    %112 = vector.broadcast %111 : vector<1x128xf32> to vector<16x128xf32>
    %113 = arith.cmpf oge, %6, %112 : vector<16x128xf32>
    %cst_31 = arith.constant 0.000000e+00 : f32
    %114 = vector.broadcast %cst_31 : f32 to vector<16x128xf32>
    %115 = arith.select %113, %6, %114 : vector<16x128xi1>, vector<16x128xf32>
    %cst_32 = arith.constant 1.000000e+00 : f32
    %cst_33 = arith.constant 0.000000e+00 : f32
    %116 = vector.broadcast %cst_32 : f32 to vector<16x128xf32>
    %117 = vector.broadcast %cst_33 : f32 to vector<16x128xf32>
    %118 = arith.select %113, %116, %117 : vector<16x128xi1>, vector<16x128xf32>
    %cst_34 = arith.constant dense<0.000000e+00> : vector<128xf32>
    %119 = vector.multi_reduction <add>, %118, %cst_34 [0] : vector<16x128xf32> to vector<128xf32>
    %120 = vector.shape_cast %119 : vector<128xf32> to vector<1x128xf32>
    %cst_35 = arith.constant dense<0.000000e+00> : vector<128xf32>
    %121 = vector.multi_reduction <add>, %115, %cst_35 [0] : vector<16x128xf32> to vector<128xf32>
    %122 = vector.shape_cast %121 : vector<128xf32> to vector<1x128xf32>
    %123 = arith.mulf %115, %115 : vector<16x128xf32>
    %cst_36 = arith.constant dense<0.000000e+00> : vector<128xf32>
    %124 = vector.multi_reduction <add>, %123, %cst_36 [0] : vector<16x128xf32> to vector<128xf32>
    %125 = vector.shape_cast %124 : vector<128xf32> to vector<1x128xf32>
    %cst_37 = arith.constant 1.000000e+00 : f32
    %126 = vector.broadcast %cst_37 : f32 to vector<1x128xf32>
    %127 = arith.divf %126, %120 : vector<1x128xf32>
    %128 = arith.mulf %122, %127 : vector<1x128xf32>
    %129 = arith.mulf %125, %127 : vector<1x128xf32>
    %130 = arith.mulf %128, %128 : vector<1x128xf32>
    %131 = arith.subf %129, %130 : vector<1x128xf32>
    %132 = arith.mulf %120, %131 : vector<1x128xf32>
    %cst_38 = arith.constant 1.000000e+00 : f32
    %133 = vector.broadcast %cst_38 : f32 to vector<1x128xf32>
    %134 = arith.subf %133, %132 : vector<1x128xf32>
    %135 = arith.mulf %134, %127 : vector<1x128xf32>
    %cst_39 = arith.constant 0.000000e+00 : f32
    %136 = vector.broadcast %cst_39 : f32 to vector<1x128xf32>
    %137 = arith.maximumf %135, %136 : vector<1x128xf32>
    %138 = math.sqrt %137 : vector<1x128xf32>
    %139 = arith.subf %128, %138 : vector<1x128xf32>
    %140 = arith.cmpf ole, %139, %111 : vector<1x128xf32>
    %141 = arith.cmpf ogt, %120, %110 : vector<1x128xf32>
    %142 = arith.andi %140, %141 : vector<1x128xi1>
    %143 = arith.select %142, %139, %109 : vector<1x128xi1>, vector<1x128xf32>
    %144 = arith.select %142, %120, %110 : vector<1x128xi1>, vector<1x128xf32>
    %145 = vector.extract_strided_slice %6 {offsets = [4, 0], sizes = [1, 128], strides = [1, 1]} : vector<16x128xf32> to vector<1x128xf32>
    %146 = vector.broadcast %145 : vector<1x128xf32> to vector<16x128xf32>
    %147 = arith.cmpf oge, %6, %146 : vector<16x128xf32>
    %cst_40 = arith.constant 0.000000e+00 : f32
    %148 = vector.broadcast %cst_40 : f32 to vector<16x128xf32>
    %149 = arith.select %147, %6, %148 : vector<16x128xi1>, vector<16x128xf32>
    %cst_41 = arith.constant 1.000000e+00 : f32
    %cst_42 = arith.constant 0.000000e+00 : f32
    %150 = vector.broadcast %cst_41 : f32 to vector<16x128xf32>
    %151 = vector.broadcast %cst_42 : f32 to vector<16x128xf32>
    %152 = arith.select %147, %150, %151 : vector<16x128xi1>, vector<16x128xf32>
    %cst_43 = arith.constant dense<0.000000e+00> : vector<128xf32>
    %153 = vector.multi_reduction <add>, %152, %cst_43 [0] : vector<16x128xf32> to vector<128xf32>
    %154 = vector.shape_cast %153 : vector<128xf32> to vector<1x128xf32>
    %cst_44 = arith.constant dense<0.000000e+00> : vector<128xf32>
    %155 = vector.multi_reduction <add>, %149, %cst_44 [0] : vector<16x128xf32> to vector<128xf32>
    %156 = vector.shape_cast %155 : vector<128xf32> to vector<1x128xf32>
    %157 = arith.mulf %149, %149 : vector<16x128xf32>
    %cst_45 = arith.constant dense<0.000000e+00> : vector<128xf32>
    %158 = vector.multi_reduction <add>, %157, %cst_45 [0] : vector<16x128xf32> to vector<128xf32>
    %159 = vector.shape_cast %158 : vector<128xf32> to vector<1x128xf32>
    %cst_46 = arith.constant 1.000000e+00 : f32
    %160 = vector.broadcast %cst_46 : f32 to vector<1x128xf32>
    %161 = arith.divf %160, %154 : vector<1x128xf32>
    %162 = arith.mulf %156, %161 : vector<1x128xf32>
    %163 = arith.mulf %159, %161 : vector<1x128xf32>
    %164 = arith.mulf %162, %162 : vector<1x128xf32>
    %165 = arith.subf %163, %164 : vector<1x128xf32>
    %166 = arith.mulf %154, %165 : vector<1x128xf32>
    %cst_47 = arith.constant 1.000000e+00 : f32
    %167 = vector.broadcast %cst_47 : f32 to vector<1x128xf32>
    %168 = arith.subf %167, %166 : vector<1x128xf32>
    %169 = arith.mulf %168, %161 : vector<1x128xf32>
    %cst_48 = arith.constant 0.000000e+00 : f32
    %170 = vector.broadcast %cst_48 : f32 to vector<1x128xf32>
    %171 = arith.maximumf %169, %170 : vector<1x128xf32>
    %172 = math.sqrt %171 : vector<1x128xf32>
    %173 = arith.subf %162, %172 : vector<1x128xf32>
    %174 = arith.cmpf ole, %173, %145 : vector<1x128xf32>
    %175 = arith.cmpf ogt, %154, %144 : vector<1x128xf32>
    %176 = arith.andi %174, %175 : vector<1x128xi1>
    %177 = arith.select %176, %173, %143 : vector<1x128xi1>, vector<1x128xf32>
    %178 = arith.select %176, %154, %144 : vector<1x128xi1>, vector<1x128xf32>
    %179 = vector.extract_strided_slice %6 {offsets = [5, 0], sizes = [1, 128], strides = [1, 1]} : vector<16x128xf32> to vector<1x128xf32>
    %180 = vector.broadcast %179 : vector<1x128xf32> to vector<16x128xf32>
    %181 = arith.cmpf oge, %6, %180 : vector<16x128xf32>
    %cst_49 = arith.constant 0.000000e+00 : f32
    %182 = vector.broadcast %cst_49 : f32 to vector<16x128xf32>
    %183 = arith.select %181, %6, %182 : vector<16x128xi1>, vector<16x128xf32>
    %cst_50 = arith.constant 1.000000e+00 : f32
    %cst_51 = arith.constant 0.000000e+00 : f32
    %184 = vector.broadcast %cst_50 : f32 to vector<16x128xf32>
    %185 = vector.broadcast %cst_51 : f32 to vector<16x128xf32>
    %186 = arith.select %181, %184, %185 : vector<16x128xi1>, vector<16x128xf32>
    %cst_52 = arith.constant dense<0.000000e+00> : vector<128xf32>
    %187 = vector.multi_reduction <add>, %186, %cst_52 [0] : vector<16x128xf32> to vector<128xf32>
    %188 = vector.shape_cast %187 : vector<128xf32> to vector<1x128xf32>
    %cst_53 = arith.constant dense<0.000000e+00> : vector<128xf32>
    %189 = vector.multi_reduction <add>, %183, %cst_53 [0] : vector<16x128xf32> to vector<128xf32>
    %190 = vector.shape_cast %189 : vector<128xf32> to vector<1x128xf32>
    %191 = arith.mulf %183, %183 : vector<16x128xf32>
    %cst_54 = arith.constant dense<0.000000e+00> : vector<128xf32>
    %192 = vector.multi_reduction <add>, %191, %cst_54 [0] : vector<16x128xf32> to vector<128xf32>
    %193 = vector.shape_cast %192 : vector<128xf32> to vector<1x128xf32>
    %cst_55 = arith.constant 1.000000e+00 : f32
    %194 = vector.broadcast %cst_55 : f32 to vector<1x128xf32>
    %195 = arith.divf %194, %188 : vector<1x128xf32>
    %196 = arith.mulf %190, %195 : vector<1x128xf32>
    %197 = arith.mulf %193, %195 : vector<1x128xf32>
    %198 = arith.mulf %196, %196 : vector<1x128xf32>
    %199 = arith.subf %197, %198 : vector<1x128xf32>
    %200 = arith.mulf %188, %199 : vector<1x128xf32>
    %cst_56 = arith.constant 1.000000e+00 : f32
    %201 = vector.broadcast %cst_56 : f32 to vector<1x128xf32>
    %202 = arith.subf %201, %200 : vector<1x128xf32>
    %203 = arith.mulf %202, %195 : vector<1x128xf32>
    %cst_57 = arith.constant 0.000000e+00 : f32
    %204 = vector.broadcast %cst_57 : f32 to vector<1x128xf32>
    %205 = arith.maximumf %203, %204 : vector<1x128xf32>
    %206 = math.sqrt %205 : vector<1x128xf32>
    %207 = arith.subf %196, %206 : vector<1x128xf32>
    %208 = arith.cmpf ole, %207, %179 : vector<1x128xf32>
    %209 = arith.cmpf ogt, %188, %178 : vector<1x128xf32>
    %210 = arith.andi %208, %209 : vector<1x128xi1>
    %211 = arith.select %210, %207, %177 : vector<1x128xi1>, vector<1x128xf32>
    %212 = arith.select %210, %188, %178 : vector<1x128xi1>, vector<1x128xf32>
    %213 = vector.extract_strided_slice %6 {offsets = [6, 0], sizes = [1, 128], strides = [1, 1]} : vector<16x128xf32> to vector<1x128xf32>
    %214 = vector.broadcast %213 : vector<1x128xf32> to vector<16x128xf32>
    %215 = arith.cmpf oge, %6, %214 : vector<16x128xf32>
    %cst_58 = arith.constant 0.000000e+00 : f32
    %216 = vector.broadcast %cst_58 : f32 to vector<16x128xf32>
    %217 = arith.select %215, %6, %216 : vector<16x128xi1>, vector<16x128xf32>
    %cst_59 = arith.constant 1.000000e+00 : f32
    %cst_60 = arith.constant 0.000000e+00 : f32
    %218 = vector.broadcast %cst_59 : f32 to vector<16x128xf32>
    %219 = vector.broadcast %cst_60 : f32 to vector<16x128xf32>
    %220 = arith.select %215, %218, %219 : vector<16x128xi1>, vector<16x128xf32>
    %cst_61 = arith.constant dense<0.000000e+00> : vector<128xf32>
    %221 = vector.multi_reduction <add>, %220, %cst_61 [0] : vector<16x128xf32> to vector<128xf32>
    %222 = vector.shape_cast %221 : vector<128xf32> to vector<1x128xf32>
    %cst_62 = arith.constant dense<0.000000e+00> : vector<128xf32>
    %223 = vector.multi_reduction <add>, %217, %cst_62 [0] : vector<16x128xf32> to vector<128xf32>
    %224 = vector.shape_cast %223 : vector<128xf32> to vector<1x128xf32>
    %225 = arith.mulf %217, %217 : vector<16x128xf32>
    %cst_63 = arith.constant dense<0.000000e+00> : vector<128xf32>
    %226 = vector.multi_reduction <add>, %225, %cst_63 [0] : vector<16x128xf32> to vector<128xf32>
    %227 = vector.shape_cast %226 : vector<128xf32> to vector<1x128xf32>
    %cst_64 = arith.constant 1.000000e+00 : f32
    %228 = vector.broadcast %cst_64 : f32 to vector<1x128xf32>
    %229 = arith.divf %228, %222 : vector<1x128xf32>
    %230 = arith.mulf %224, %229 : vector<1x128xf32>
    %231 = arith.mulf %227, %229 : vector<1x128xf32>
    %232 = arith.mulf %230, %230 : vector<1x128xf32>
    %233 = arith.subf %231, %232 : vector<1x128xf32>
    %234 = arith.mulf %222, %233 : vector<1x128xf32>
    %cst_65 = arith.constant 1.000000e+00 : f32
    %235 = vector.broadcast %cst_65 : f32 to vector<1x128xf32>
    %236 = arith.subf %235, %234 : vector<1x128xf32>
    %237 = arith.mulf %236, %229 : vector<1x128xf32>
    %cst_66 = arith.constant 0.000000e+00 : f32
    %238 = vector.broadcast %cst_66 : f32 to vector<1x128xf32>
    %239 = arith.maximumf %237, %238 : vector<1x128xf32>
    %240 = math.sqrt %239 : vector<1x128xf32>
    %241 = arith.subf %230, %240 : vector<1x128xf32>
    %242 = arith.cmpf ole, %241, %213 : vector<1x128xf32>
    %243 = arith.cmpf ogt, %222, %212 : vector<1x128xf32>
    %244 = arith.andi %242, %243 : vector<1x128xi1>
    %245 = arith.select %244, %241, %211 : vector<1x128xi1>, vector<1x128xf32>
    %246 = arith.select %244, %222, %212 : vector<1x128xi1>, vector<1x128xf32>
    %247 = vector.extract_strided_slice %6 {offsets = [7, 0], sizes = [1, 128], strides = [1, 1]} : vector<16x128xf32> to vector<1x128xf32>
    %248 = vector.broadcast %247 : vector<1x128xf32> to vector<16x128xf32>
    %249 = arith.cmpf oge, %6, %248 : vector<16x128xf32>
    %cst_67 = arith.constant 0.000000e+00 : f32
    %250 = vector.broadcast %cst_67 : f32 to vector<16x128xf32>
    %251 = arith.select %249, %6, %250 : vector<16x128xi1>, vector<16x128xf32>
    %cst_68 = arith.constant 1.000000e+00 : f32
    %cst_69 = arith.constant 0.000000e+00 : f32
    %252 = vector.broadcast %cst_68 : f32 to vector<16x128xf32>
    %253 = vector.broadcast %cst_69 : f32 to vector<16x128xf32>
    %254 = arith.select %249, %252, %253 : vector<16x128xi1>, vector<16x128xf32>
    %cst_70 = arith.constant dense<0.000000e+00> : vector<128xf32>
    %255 = vector.multi_reduction <add>, %254, %cst_70 [0] : vector<16x128xf32> to vector<128xf32>
    %256 = vector.shape_cast %255 : vector<128xf32> to vector<1x128xf32>
    %cst_71 = arith.constant dense<0.000000e+00> : vector<128xf32>
    %257 = vector.multi_reduction <add>, %251, %cst_71 [0] : vector<16x128xf32> to vector<128xf32>
    %258 = vector.shape_cast %257 : vector<128xf32> to vector<1x128xf32>
    %259 = arith.mulf %251, %251 : vector<16x128xf32>
    %cst_72 = arith.constant dense<0.000000e+00> : vector<128xf32>
    %260 = vector.multi_reduction <add>, %259, %cst_72 [0] : vector<16x128xf32> to vector<128xf32>
    %261 = vector.shape_cast %260 : vector<128xf32> to vector<1x128xf32>
    %cst_73 = arith.constant 1.000000e+00 : f32
    %262 = vector.broadcast %cst_73 : f32 to vector<1x128xf32>
    %263 = arith.divf %262, %256 : vector<1x128xf32>
    %264 = arith.mulf %258, %263 : vector<1x128xf32>
    %265 = arith.mulf %261, %263 : vector<1x128xf32>
    %266 = arith.mulf %264, %264 : vector<1x128xf32>
    %267 = arith.subf %265, %266 : vector<1x128xf32>
    %268 = arith.mulf %256, %267 : vector<1x128xf32>
    %cst_74 = arith.constant 1.000000e+00 : f32
    %269 = vector.broadcast %cst_74 : f32 to vector<1x128xf32>
    %270 = arith.subf %269, %268 : vector<1x128xf32>
    %271 = arith.mulf %270, %263 : vector<1x128xf32>
    %cst_75 = arith.constant 0.000000e+00 : f32
    %272 = vector.broadcast %cst_75 : f32 to vector<1x128xf32>
    %273 = arith.maximumf %271, %272 : vector<1x128xf32>
    %274 = math.sqrt %273 : vector<1x128xf32>
    %275 = arith.subf %264, %274 : vector<1x128xf32>
    %276 = arith.cmpf ole, %275, %247 : vector<1x128xf32>
    %277 = arith.cmpf ogt, %256, %246 : vector<1x128xf32>
    %278 = arith.andi %276, %277 : vector<1x128xi1>
    %279 = arith.select %278, %275, %245 : vector<1x128xi1>, vector<1x128xf32>
    %280 = arith.select %278, %256, %246 : vector<1x128xi1>, vector<1x128xf32>
    %281 = vector.extract_strided_slice %6 {offsets = [8, 0], sizes = [1, 128], strides = [1, 1]} : vector<16x128xf32> to vector<1x128xf32>
    %282 = vector.broadcast %281 : vector<1x128xf32> to vector<16x128xf32>
    %283 = arith.cmpf oge, %6, %282 : vector<16x128xf32>
    %cst_76 = arith.constant 0.000000e+00 : f32
    %284 = vector.broadcast %cst_76 : f32 to vector<16x128xf32>
    %285 = arith.select %283, %6, %284 : vector<16x128xi1>, vector<16x128xf32>
    %cst_77 = arith.constant 1.000000e+00 : f32
    %cst_78 = arith.constant 0.000000e+00 : f32
    %286 = vector.broadcast %cst_77 : f32 to vector<16x128xf32>
    %287 = vector.broadcast %cst_78 : f32 to vector<16x128xf32>
    %288 = arith.select %283, %286, %287 : vector<16x128xi1>, vector<16x128xf32>
    %cst_79 = arith.constant dense<0.000000e+00> : vector<128xf32>
    %289 = vector.multi_reduction <add>, %288, %cst_79 [0] : vector<16x128xf32> to vector<128xf32>
    %290 = vector.shape_cast %289 : vector<128xf32> to vector<1x128xf32>
    %cst_80 = arith.constant dense<0.000000e+00> : vector<128xf32>
    %291 = vector.multi_reduction <add>, %285, %cst_80 [0] : vector<16x128xf32> to vector<128xf32>
    %292 = vector.shape_cast %291 : vector<128xf32> to vector<1x128xf32>
    %293 = arith.mulf %285, %285 : vector<16x128xf32>
    %cst_81 = arith.constant dense<0.000000e+00> : vector<128xf32>
    %294 = vector.multi_reduction <add>, %293, %cst_81 [0] : vector<16x128xf32> to vector<128xf32>
    %295 = vector.shape_cast %294 : vector<128xf32> to vector<1x128xf32>
    %cst_82 = arith.constant 1.000000e+00 : f32
    %296 = vector.broadcast %cst_82 : f32 to vector<1x128xf32>
    %297 = arith.divf %296, %290 : vector<1x128xf32>
    %298 = arith.mulf %292, %297 : vector<1x128xf32>
    %299 = arith.mulf %295, %297 : vector<1x128xf32>
    %300 = arith.mulf %298, %298 : vector<1x128xf32>
    %301 = arith.subf %299, %300 : vector<1x128xf32>
    %302 = arith.mulf %290, %301 : vector<1x128xf32>
    %cst_83 = arith.constant 1.000000e+00 : f32
    %303 = vector.broadcast %cst_83 : f32 to vector<1x128xf32>
    %304 = arith.subf %303, %302 : vector<1x128xf32>
    %305 = arith.mulf %304, %297 : vector<1x128xf32>
    %cst_84 = arith.constant 0.000000e+00 : f32
    %306 = vector.broadcast %cst_84 : f32 to vector<1x128xf32>
    %307 = arith.maximumf %305, %306 : vector<1x128xf32>
    %308 = math.sqrt %307 : vector<1x128xf32>
    %309 = arith.subf %298, %308 : vector<1x128xf32>
    %310 = arith.cmpf ole, %309, %281 : vector<1x128xf32>
    %311 = arith.cmpf ogt, %290, %280 : vector<1x128xf32>
    %312 = arith.andi %310, %311 : vector<1x128xi1>
    %313 = arith.select %312, %309, %279 : vector<1x128xi1>, vector<1x128xf32>
    %314 = arith.select %312, %290, %280 : vector<1x128xi1>, vector<1x128xf32>
    %315 = vector.extract_strided_slice %6 {offsets = [9, 0], sizes = [1, 128], strides = [1, 1]} : vector<16x128xf32> to vector<1x128xf32>
    %316 = vector.broadcast %315 : vector<1x128xf32> to vector<16x128xf32>
    %317 = arith.cmpf oge, %6, %316 : vector<16x128xf32>
    %cst_85 = arith.constant 0.000000e+00 : f32
    %318 = vector.broadcast %cst_85 : f32 to vector<16x128xf32>
    %319 = arith.select %317, %6, %318 : vector<16x128xi1>, vector<16x128xf32>
    %cst_86 = arith.constant 1.000000e+00 : f32
    %cst_87 = arith.constant 0.000000e+00 : f32
    %320 = vector.broadcast %cst_86 : f32 to vector<16x128xf32>
    %321 = vector.broadcast %cst_87 : f32 to vector<16x128xf32>
    %322 = arith.select %317, %320, %321 : vector<16x128xi1>, vector<16x128xf32>
    %cst_88 = arith.constant dense<0.000000e+00> : vector<128xf32>
    %323 = vector.multi_reduction <add>, %322, %cst_88 [0] : vector<16x128xf32> to vector<128xf32>
    %324 = vector.shape_cast %323 : vector<128xf32> to vector<1x128xf32>
    %cst_89 = arith.constant dense<0.000000e+00> : vector<128xf32>
    %325 = vector.multi_reduction <add>, %319, %cst_89 [0] : vector<16x128xf32> to vector<128xf32>
    %326 = vector.shape_cast %325 : vector<128xf32> to vector<1x128xf32>
    %327 = arith.mulf %319, %319 : vector<16x128xf32>
    %cst_90 = arith.constant dense<0.000000e+00> : vector<128xf32>
    %328 = vector.multi_reduction <add>, %327, %cst_90 [0] : vector<16x128xf32> to vector<128xf32>
    %329 = vector.shape_cast %328 : vector<128xf32> to vector<1x128xf32>
    %cst_91 = arith.constant 1.000000e+00 : f32
    %330 = vector.broadcast %cst_91 : f32 to vector<1x128xf32>
    %331 = arith.divf %330, %324 : vector<1x128xf32>
    %332 = arith.mulf %326, %331 : vector<1x128xf32>
    %333 = arith.mulf %329, %331 : vector<1x128xf32>
    %334 = arith.mulf %332, %332 : vector<1x128xf32>
    %335 = arith.subf %333, %334 : vector<1x128xf32>
    %336 = arith.mulf %324, %335 : vector<1x128xf32>
    %cst_92 = arith.constant 1.000000e+00 : f32
    %337 = vector.broadcast %cst_92 : f32 to vector<1x128xf32>
    %338 = arith.subf %337, %336 : vector<1x128xf32>
    %339 = arith.mulf %338, %331 : vector<1x128xf32>
    %cst_93 = arith.constant 0.000000e+00 : f32
    %340 = vector.broadcast %cst_93 : f32 to vector<1x128xf32>
    %341 = arith.maximumf %339, %340 : vector<1x128xf32>
    %342 = math.sqrt %341 : vector<1x128xf32>
    %343 = arith.subf %332, %342 : vector<1x128xf32>
    %344 = arith.cmpf ole, %343, %315 : vector<1x128xf32>
    %345 = arith.cmpf ogt, %324, %314 : vector<1x128xf32>
    %346 = arith.andi %344, %345 : vector<1x128xi1>
    %347 = arith.select %346, %343, %313 : vector<1x128xi1>, vector<1x128xf32>
    %348 = arith.select %346, %324, %314 : vector<1x128xi1>, vector<1x128xf32>
    %349 = vector.extract_strided_slice %6 {offsets = [10, 0], sizes = [1, 128], strides = [1, 1]} : vector<16x128xf32> to vector<1x128xf32>
    %350 = vector.broadcast %349 : vector<1x128xf32> to vector<16x128xf32>
    %351 = arith.cmpf oge, %6, %350 : vector<16x128xf32>
    %cst_94 = arith.constant 0.000000e+00 : f32
    %352 = vector.broadcast %cst_94 : f32 to vector<16x128xf32>
    %353 = arith.select %351, %6, %352 : vector<16x128xi1>, vector<16x128xf32>
    %cst_95 = arith.constant 1.000000e+00 : f32
    %cst_96 = arith.constant 0.000000e+00 : f32
    %354 = vector.broadcast %cst_95 : f32 to vector<16x128xf32>
    %355 = vector.broadcast %cst_96 : f32 to vector<16x128xf32>
    %356 = arith.select %351, %354, %355 : vector<16x128xi1>, vector<16x128xf32>
    %cst_97 = arith.constant dense<0.000000e+00> : vector<128xf32>
    %357 = vector.multi_reduction <add>, %356, %cst_97 [0] : vector<16x128xf32> to vector<128xf32>
    %358 = vector.shape_cast %357 : vector<128xf32> to vector<1x128xf32>
    %cst_98 = arith.constant dense<0.000000e+00> : vector<128xf32>
    %359 = vector.multi_reduction <add>, %353, %cst_98 [0] : vector<16x128xf32> to vector<128xf32>
    %360 = vector.shape_cast %359 : vector<128xf32> to vector<1x128xf32>
    %361 = arith.mulf %353, %353 : vector<16x128xf32>
    %cst_99 = arith.constant dense<0.000000e+00> : vector<128xf32>
    %362 = vector.multi_reduction <add>, %361, %cst_99 [0] : vector<16x128xf32> to vector<128xf32>
    %363 = vector.shape_cast %362 : vector<128xf32> to vector<1x128xf32>
    %cst_100 = arith.constant 1.000000e+00 : f32
    %364 = vector.broadcast %cst_100 : f32 to vector<1x128xf32>
    %365 = arith.divf %364, %358 : vector<1x128xf32>
    %366 = arith.mulf %360, %365 : vector<1x128xf32>
    %367 = arith.mulf %363, %365 : vector<1x128xf32>
    %368 = arith.mulf %366, %366 : vector<1x128xf32>
    %369 = arith.subf %367, %368 : vector<1x128xf32>
    %370 = arith.mulf %358, %369 : vector<1x128xf32>
    %cst_101 = arith.constant 1.000000e+00 : f32
    %371 = vector.broadcast %cst_101 : f32 to vector<1x128xf32>
    %372 = arith.subf %371, %370 : vector<1x128xf32>
    %373 = arith.mulf %372, %365 : vector<1x128xf32>
    %cst_102 = arith.constant 0.000000e+00 : f32
    %374 = vector.broadcast %cst_102 : f32 to vector<1x128xf32>
    %375 = arith.maximumf %373, %374 : vector<1x128xf32>
    %376 = math.sqrt %375 : vector<1x128xf32>
    %377 = arith.subf %366, %376 : vector<1x128xf32>
    %378 = arith.cmpf ole, %377, %349 : vector<1x128xf32>
    %379 = arith.cmpf ogt, %358, %348 : vector<1x128xf32>
    %380 = arith.andi %378, %379 : vector<1x128xi1>
    %381 = arith.select %380, %377, %347 : vector<1x128xi1>, vector<1x128xf32>
    %382 = arith.select %380, %358, %348 : vector<1x128xi1>, vector<1x128xf32>
    %383 = vector.extract_strided_slice %6 {offsets = [11, 0], sizes = [1, 128], strides = [1, 1]} : vector<16x128xf32> to vector<1x128xf32>
    %384 = vector.broadcast %383 : vector<1x128xf32> to vector<16x128xf32>
    %385 = arith.cmpf oge, %6, %384 : vector<16x128xf32>
    %cst_103 = arith.constant 0.000000e+00 : f32
    %386 = vector.broadcast %cst_103 : f32 to vector<16x128xf32>
    %387 = arith.select %385, %6, %386 : vector<16x128xi1>, vector<16x128xf32>
    %cst_104 = arith.constant 1.000000e+00 : f32
    %cst_105 = arith.constant 0.000000e+00 : f32
    %388 = vector.broadcast %cst_104 : f32 to vector<16x128xf32>
    %389 = vector.broadcast %cst_105 : f32 to vector<16x128xf32>
    %390 = arith.select %385, %388, %389 : vector<16x128xi1>, vector<16x128xf32>
    %cst_106 = arith.constant dense<0.000000e+00> : vector<128xf32>
    %391 = vector.multi_reduction <add>, %390, %cst_106 [0] : vector<16x128xf32> to vector<128xf32>
    %392 = vector.shape_cast %391 : vector<128xf32> to vector<1x128xf32>
    %cst_107 = arith.constant dense<0.000000e+00> : vector<128xf32>
    %393 = vector.multi_reduction <add>, %387, %cst_107 [0] : vector<16x128xf32> to vector<128xf32>
    %394 = vector.shape_cast %393 : vector<128xf32> to vector<1x128xf32>
    %395 = arith.mulf %387, %387 : vector<16x128xf32>
    %cst_108 = arith.constant dense<0.000000e+00> : vector<128xf32>
    %396 = vector.multi_reduction <add>, %395, %cst_108 [0] : vector<16x128xf32> to vector<128xf32>
    %397 = vector.shape_cast %396 : vector<128xf32> to vector<1x128xf32>
    %cst_109 = arith.constant 1.000000e+00 : f32
    %398 = vector.broadcast %cst_109 : f32 to vector<1x128xf32>
    %399 = arith.divf %398, %392 : vector<1x128xf32>
    %400 = arith.mulf %394, %399 : vector<1x128xf32>
    %401 = arith.mulf %397, %399 : vector<1x128xf32>
    %402 = arith.mulf %400, %400 : vector<1x128xf32>
    %403 = arith.subf %401, %402 : vector<1x128xf32>
    %404 = arith.mulf %392, %403 : vector<1x128xf32>
    %cst_110 = arith.constant 1.000000e+00 : f32
    %405 = vector.broadcast %cst_110 : f32 to vector<1x128xf32>
    %406 = arith.subf %405, %404 : vector<1x128xf32>
    %407 = arith.mulf %406, %399 : vector<1x128xf32>
    %cst_111 = arith.constant 0.000000e+00 : f32
    %408 = vector.broadcast %cst_111 : f32 to vector<1x128xf32>
    %409 = arith.maximumf %407, %408 : vector<1x128xf32>
    %410 = math.sqrt %409 : vector<1x128xf32>
    %411 = arith.subf %400, %410 : vector<1x128xf32>
    %412 = arith.cmpf ole, %411, %383 : vector<1x128xf32>
    %413 = arith.cmpf ogt, %392, %382 : vector<1x128xf32>
    %414 = arith.andi %412, %413 : vector<1x128xi1>
    %415 = arith.select %414, %411, %381 : vector<1x128xi1>, vector<1x128xf32>
    %416 = arith.select %414, %392, %382 : vector<1x128xi1>, vector<1x128xf32>
    %417 = vector.extract_strided_slice %6 {offsets = [12, 0], sizes = [1, 128], strides = [1, 1]} : vector<16x128xf32> to vector<1x128xf32>
    %418 = vector.broadcast %417 : vector<1x128xf32> to vector<16x128xf32>
    %419 = arith.cmpf oge, %6, %418 : vector<16x128xf32>
    %cst_112 = arith.constant 0.000000e+00 : f32
    %420 = vector.broadcast %cst_112 : f32 to vector<16x128xf32>
    %421 = arith.select %419, %6, %420 : vector<16x128xi1>, vector<16x128xf32>
    %cst_113 = arith.constant 1.000000e+00 : f32
    %cst_114 = arith.constant 0.000000e+00 : f32
    %422 = vector.broadcast %cst_113 : f32 to vector<16x128xf32>
    %423 = vector.broadcast %cst_114 : f32 to vector<16x128xf32>
    %424 = arith.select %419, %422, %423 : vector<16x128xi1>, vector<16x128xf32>
    %cst_115 = arith.constant dense<0.000000e+00> : vector<128xf32>
    %425 = vector.multi_reduction <add>, %424, %cst_115 [0] : vector<16x128xf32> to vector<128xf32>
    %426 = vector.shape_cast %425 : vector<128xf32> to vector<1x128xf32>
    %cst_116 = arith.constant dense<0.000000e+00> : vector<128xf32>
    %427 = vector.multi_reduction <add>, %421, %cst_116 [0] : vector<16x128xf32> to vector<128xf32>
    %428 = vector.shape_cast %427 : vector<128xf32> to vector<1x128xf32>
    %429 = arith.mulf %421, %421 : vector<16x128xf32>
    %cst_117 = arith.constant dense<0.000000e+00> : vector<128xf32>
    %430 = vector.multi_reduction <add>, %429, %cst_117 [0] : vector<16x128xf32> to vector<128xf32>
    %431 = vector.shape_cast %430 : vector<128xf32> to vector<1x128xf32>
    %cst_118 = arith.constant 1.000000e+00 : f32
    %432 = vector.broadcast %cst_118 : f32 to vector<1x128xf32>
    %433 = arith.divf %432, %426 : vector<1x128xf32>
    %434 = arith.mulf %428, %433 : vector<1x128xf32>
    %435 = arith.mulf %431, %433 : vector<1x128xf32>
    %436 = arith.mulf %434, %434 : vector<1x128xf32>
    %437 = arith.subf %435, %436 : vector<1x128xf32>
    %438 = arith.mulf %426, %437 : vector<1x128xf32>
    %cst_119 = arith.constant 1.000000e+00 : f32
    %439 = vector.broadcast %cst_119 : f32 to vector<1x128xf32>
    %440 = arith.subf %439, %438 : vector<1x128xf32>
    %441 = arith.mulf %440, %433 : vector<1x128xf32>
    %cst_120 = arith.constant 0.000000e+00 : f32
    %442 = vector.broadcast %cst_120 : f32 to vector<1x128xf32>
    %443 = arith.maximumf %441, %442 : vector<1x128xf32>
    %444 = math.sqrt %443 : vector<1x128xf32>
    %445 = arith.subf %434, %444 : vector<1x128xf32>
    %446 = arith.cmpf ole, %445, %417 : vector<1x128xf32>
    %447 = arith.cmpf ogt, %426, %416 : vector<1x128xf32>
    %448 = arith.andi %446, %447 : vector<1x128xi1>
    %449 = arith.select %448, %445, %415 : vector<1x128xi1>, vector<1x128xf32>
    %450 = arith.select %448, %426, %416 : vector<1x128xi1>, vector<1x128xf32>
    %451 = vector.extract_strided_slice %6 {offsets = [13, 0], sizes = [1, 128], strides = [1, 1]} : vector<16x128xf32> to vector<1x128xf32>
    %452 = vector.broadcast %451 : vector<1x128xf32> to vector<16x128xf32>
    %453 = arith.cmpf oge, %6, %452 : vector<16x128xf32>
    %cst_121 = arith.constant 0.000000e+00 : f32
    %454 = vector.broadcast %cst_121 : f32 to vector<16x128xf32>
    %455 = arith.select %453, %6, %454 : vector<16x128xi1>, vector<16x128xf32>
    %cst_122 = arith.constant 1.000000e+00 : f32
    %cst_123 = arith.constant 0.000000e+00 : f32
    %456 = vector.broadcast %cst_122 : f32 to vector<16x128xf32>
    %457 = vector.broadcast %cst_123 : f32 to vector<16x128xf32>
    %458 = arith.select %453, %456, %457 : vector<16x128xi1>, vector<16x128xf32>
    %cst_124 = arith.constant dense<0.000000e+00> : vector<128xf32>
    %459 = vector.multi_reduction <add>, %458, %cst_124 [0] : vector<16x128xf32> to vector<128xf32>
    %460 = vector.shape_cast %459 : vector<128xf32> to vector<1x128xf32>
    %cst_125 = arith.constant dense<0.000000e+00> : vector<128xf32>
    %461 = vector.multi_reduction <add>, %455, %cst_125 [0] : vector<16x128xf32> to vector<128xf32>
    %462 = vector.shape_cast %461 : vector<128xf32> to vector<1x128xf32>
    %463 = arith.mulf %455, %455 : vector<16x128xf32>
    %cst_126 = arith.constant dense<0.000000e+00> : vector<128xf32>
    %464 = vector.multi_reduction <add>, %463, %cst_126 [0] : vector<16x128xf32> to vector<128xf32>
    %465 = vector.shape_cast %464 : vector<128xf32> to vector<1x128xf32>
    %cst_127 = arith.constant 1.000000e+00 : f32
    %466 = vector.broadcast %cst_127 : f32 to vector<1x128xf32>
    %467 = arith.divf %466, %460 : vector<1x128xf32>
    %468 = arith.mulf %462, %467 : vector<1x128xf32>
    %469 = arith.mulf %465, %467 : vector<1x128xf32>
    %470 = arith.mulf %468, %468 : vector<1x128xf32>
    %471 = arith.subf %469, %470 : vector<1x128xf32>
    %472 = arith.mulf %460, %471 : vector<1x128xf32>
    %cst_128 = arith.constant 1.000000e+00 : f32
    %473 = vector.broadcast %cst_128 : f32 to vector<1x128xf32>
    %474 = arith.subf %473, %472 : vector<1x128xf32>
    %475 = arith.mulf %474, %467 : vector<1x128xf32>
    %cst_129 = arith.constant 0.000000e+00 : f32
    %476 = vector.broadcast %cst_129 : f32 to vector<1x128xf32>
    %477 = arith.maximumf %475, %476 : vector<1x128xf32>
    %478 = math.sqrt %477 : vector<1x128xf32>
    %479 = arith.subf %468, %478 : vector<1x128xf32>
    %480 = arith.cmpf ole, %479, %451 : vector<1x128xf32>
    %481 = arith.cmpf ogt, %460, %450 : vector<1x128xf32>
    %482 = arith.andi %480, %481 : vector<1x128xi1>
    %483 = arith.select %482, %479, %449 : vector<1x128xi1>, vector<1x128xf32>
    %484 = arith.select %482, %460, %450 : vector<1x128xi1>, vector<1x128xf32>
    %485 = vector.extract_strided_slice %6 {offsets = [14, 0], sizes = [1, 128], strides = [1, 1]} : vector<16x128xf32> to vector<1x128xf32>
    %486 = vector.broadcast %485 : vector<1x128xf32> to vector<16x128xf32>
    %487 = arith.cmpf oge, %6, %486 : vector<16x128xf32>
    %cst_130 = arith.constant 0.000000e+00 : f32
    %488 = vector.broadcast %cst_130 : f32 to vector<16x128xf32>
    %489 = arith.select %487, %6, %488 : vector<16x128xi1>, vector<16x128xf32>
    %cst_131 = arith.constant 1.000000e+00 : f32
    %cst_132 = arith.constant 0.000000e+00 : f32
    %490 = vector.broadcast %cst_131 : f32 to vector<16x128xf32>
    %491 = vector.broadcast %cst_132 : f32 to vector<16x128xf32>
    %492 = arith.select %487, %490, %491 : vector<16x128xi1>, vector<16x128xf32>
    %cst_133 = arith.constant dense<0.000000e+00> : vector<128xf32>
    %493 = vector.multi_reduction <add>, %492, %cst_133 [0] : vector<16x128xf32> to vector<128xf32>
    %494 = vector.shape_cast %493 : vector<128xf32> to vector<1x128xf32>
    %cst_134 = arith.constant dense<0.000000e+00> : vector<128xf32>
    %495 = vector.multi_reduction <add>, %489, %cst_134 [0] : vector<16x128xf32> to vector<128xf32>
    %496 = vector.shape_cast %495 : vector<128xf32> to vector<1x128xf32>
    %497 = arith.mulf %489, %489 : vector<16x128xf32>
    %cst_135 = arith.constant dense<0.000000e+00> : vector<128xf32>
    %498 = vector.multi_reduction <add>, %497, %cst_135 [0] : vector<16x128xf32> to vector<128xf32>
    %499 = vector.shape_cast %498 : vector<128xf32> to vector<1x128xf32>
    %cst_136 = arith.constant 1.000000e+00 : f32
    %500 = vector.broadcast %cst_136 : f32 to vector<1x128xf32>
    %501 = arith.divf %500, %494 : vector<1x128xf32>
    %502 = arith.mulf %496, %501 : vector<1x128xf32>
    %503 = arith.mulf %499, %501 : vector<1x128xf32>
    %504 = arith.mulf %502, %502 : vector<1x128xf32>
    %505 = arith.subf %503, %504 : vector<1x128xf32>
    %506 = arith.mulf %494, %505 : vector<1x128xf32>
    %cst_137 = arith.constant 1.000000e+00 : f32
    %507 = vector.broadcast %cst_137 : f32 to vector<1x128xf32>
    %508 = arith.subf %507, %506 : vector<1x128xf32>
    %509 = arith.mulf %508, %501 : vector<1x128xf32>
    %cst_138 = arith.constant 0.000000e+00 : f32
    %510 = vector.broadcast %cst_138 : f32 to vector<1x128xf32>
    %511 = arith.maximumf %509, %510 : vector<1x128xf32>
    %512 = math.sqrt %511 : vector<1x128xf32>
    %513 = arith.subf %502, %512 : vector<1x128xf32>
    %514 = arith.cmpf ole, %513, %485 : vector<1x128xf32>
    %515 = arith.cmpf ogt, %494, %484 : vector<1x128xf32>
    %516 = arith.andi %514, %515 : vector<1x128xi1>
    %517 = arith.select %516, %513, %483 : vector<1x128xi1>, vector<1x128xf32>
    %518 = arith.select %516, %494, %484 : vector<1x128xi1>, vector<1x128xf32>
    %519 = vector.extract_strided_slice %6 {offsets = [15, 0], sizes = [1, 128], strides = [1, 1]} : vector<16x128xf32> to vector<1x128xf32>
    %520 = vector.broadcast %519 : vector<1x128xf32> to vector<16x128xf32>
    %521 = arith.cmpf oge, %6, %520 : vector<16x128xf32>
    %cst_139 = arith.constant 0.000000e+00 : f32
    %522 = vector.broadcast %cst_139 : f32 to vector<16x128xf32>
    %523 = arith.select %521, %6, %522 : vector<16x128xi1>, vector<16x128xf32>
    %cst_140 = arith.constant 1.000000e+00 : f32
    %cst_141 = arith.constant 0.000000e+00 : f32
    %524 = vector.broadcast %cst_140 : f32 to vector<16x128xf32>
    %525 = vector.broadcast %cst_141 : f32 to vector<16x128xf32>
    %526 = arith.select %521, %524, %525 : vector<16x128xi1>, vector<16x128xf32>
    %cst_142 = arith.constant dense<0.000000e+00> : vector<128xf32>
    %527 = vector.multi_reduction <add>, %526, %cst_142 [0] : vector<16x128xf32> to vector<128xf32>
    %528 = vector.shape_cast %527 : vector<128xf32> to vector<1x128xf32>
    %cst_143 = arith.constant dense<0.000000e+00> : vector<128xf32>
    %529 = vector.multi_reduction <add>, %523, %cst_143 [0] : vector<16x128xf32> to vector<128xf32>
    %530 = vector.shape_cast %529 : vector<128xf32> to vector<1x128xf32>
    %531 = arith.mulf %523, %523 : vector<16x128xf32>
    %cst_144 = arith.constant dense<0.000000e+00> : vector<128xf32>
    %532 = vector.multi_reduction <add>, %531, %cst_144 [0] : vector<16x128xf32> to vector<128xf32>
    %533 = vector.shape_cast %532 : vector<128xf32> to vector<1x128xf32>
    %cst_145 = arith.constant 1.000000e+00 : f32
    %534 = vector.broadcast %cst_145 : f32 to vector<1x128xf32>
    %535 = arith.divf %534, %528 : vector<1x128xf32>
    %536 = arith.mulf %530, %535 : vector<1x128xf32>
    %537 = arith.mulf %533, %535 : vector<1x128xf32>
    %538 = arith.mulf %536, %536 : vector<1x128xf32>
    %539 = arith.subf %537, %538 : vector<1x128xf32>
    %540 = arith.mulf %528, %539 : vector<1x128xf32>
    %cst_146 = arith.constant 1.000000e+00 : f32
    %541 = vector.broadcast %cst_146 : f32 to vector<1x128xf32>
    %542 = arith.subf %541, %540 : vector<1x128xf32>
    %543 = arith.mulf %542, %535 : vector<1x128xf32>
    %cst_147 = arith.constant 0.000000e+00 : f32
    %544 = vector.broadcast %cst_147 : f32 to vector<1x128xf32>
    %545 = arith.maximumf %543, %544 : vector<1x128xf32>
    %546 = math.sqrt %545 : vector<1x128xf32>
    %547 = arith.subf %536, %546 : vector<1x128xf32>
    %548 = arith.cmpf ole, %547, %519 : vector<1x128xf32>
    %549 = arith.cmpf ogt, %528, %518 : vector<1x128xf32>
    %550 = arith.andi %548, %549 : vector<1x128xi1>
    %551 = arith.select %550, %547, %517 : vector<1x128xi1>, vector<1x128xf32>
    %552 = vector.broadcast %551 : vector<1x128xf32> to vector<16x128xf32>
    %553 = arith.subf %6, %552 : vector<16x128xf32>
    %cst_148 = arith.constant 0.000000e+00 : f32
    %554 = vector.broadcast %cst_148 : f32 to vector<16x128xf32>
    %555 = arith.maximumf %553, %554 : vector<16x128xf32>
    %556 = arith.mulf %555, %555 : vector<16x128xf32>
    %c0_149 = arith.constant 0 : index
    %c0_150 = arith.constant 0 : index
    %557 = vector.load %arg2[%c0_149, %c0_150] : memref<16x128xf32, #tpu.memory_space<vmem>>, vector<16x128xf32>
    tpu.vector_store %arg2[%c0_149, %c0_150], %556 {strides = array<i32>} : memref<16x128xf32, #tpu.memory_space<vmem>>, vector<16x128xf32>,
    return
  }
  func.func @transform_0(%arg0: i32) -> (i32, i32) {
    %c0_i32 = arith.constant 0 : i32
    %c0_i32_0 = arith.constant 0 : i32
    return %c0_i32, %arg0 : i32, i32
  }
  func.func @transform_1(%arg0: i32) -> (i32, i32) {
    %c0_i32 = arith.constant 0 : i32
    %c0_i32_0 = arith.constant 0 : i32
    return %c0_i32, %arg0 : i32, i32
  }
}

</mosaic_0001>

<llo_original>
// kernel: tpu_custom_call.1
$region0: #{tpu_custom_call.1}
  #allocation0 [shape = 'u32[]', space=smem, size = 0x4, offset = 0x4, fixed_abs, tag = 'smem constant byte address 0x4 - core index']
  #allocation1 [shape = 'u32[72,128]{1,0:T(1,128)}', space=vmem, size = 0x9000, scoped, tag = 'internal scratch']
  %s0 = inlined_call_operand.hbm [shape: f32[16,128], index: 0, kind: input, shape index: {}]
  %s1 = inlined_call_operand.hbm [shape: f32[16,128], index: 1, kind: output, shape index: {}]
  %s2 = sld [smem:[#allocation0]]
  $region18: #{tpu_custom_call.1} parent=0
    _
  %s4 = ssub.s32 1, %s2
  %s5 = scalar_select 0, %s4, %s2
  $region1: #{tpu_custom_call.1} parent=0
    #allocation2 [shape = 'u8[8192]{0}', space=vmem, size = 0x2000, scoped, tag = 'input window, operand 0, single buffered']
    #allocation3 [shape = 's32[1]{0}', space=sflag, size = 0x4, scoped, tag = 'scoped memory for tpu_custom_call.1']
    #allocation4 [shape = 's32[1]{0}', space=sflag, size = 0x4, scoped, tag = 'scoped memory for tpu_custom_call.1']
    #allocation5 [shape = 'u8[8192]{0}', space=vmem, size = 0x2000, scoped, tag = 'output window, operand 0, single buffered']
    %6 = vsyncpa [#allocation3], 0
    %7 = vsyncpa [#allocation4], 0
    // Predicated region
    $region2: #{tpu_custom_call.1} parent=1 // pred_check
      _
    $region3: #{tpu_custom_call.1} parent=1 // pred_check_branch
      %9 = sbr.rel (0) target = $region5
    $region4: #{tpu_custom_call.1} parent=1 // pred_region
      %11 = vsyncadd [#allocation3], 0
      %s12 = sshll.u32 %s0, 4
      %s13 = int_to_ptr.hbm [resolvable:$true] %s12
      %s14 = sshll.u32 [#allocation2], 4
      %s15 = int_to_ptr.vmem [resolvable:$true] %s14
      %20 = dma.hbm_to_vmem [thread:$0]  %s13, 256, %s15, [#allocation3], 128, 128, 8
    $region5: #{tpu_custom_call.1} parent=1 // pred_fallthru
      _
    // Predicated region
    $region6: #{tpu_custom_call.1} parent=1 // pred_check
      _
    $region7: #{tpu_custom_call.1} parent=1 // pred_check_branch
      %22 = sbr.rel (0) target = $region9
    $region8: #{tpu_custom_call.1} parent=1 // pred_region
      %24 = dma.done [#allocation3], 256
    $region9: #{tpu_custom_call.1} parent=1 // pred_fallthru
      _
    %v25 = vld [vmem:[#allocation2] sm:$0xff]
    %v26 = vld [vmem:[#allocation2 + $0x8] sm:$0xff]
    %v27 = vmax.f32 %v25, %v26
    %v28 = vrot.slane %v27, 4
    %v29 = vmax.f32 %v27, %v28
    %v30 = vrot.slane %v29, 2
    %v31 = vmax.f32 %v29, %v30
    %v32 = vrot.slane %v31, 1
    %v33 = vmax.f32 %v31, %v32
    %v34 = vsub.f32 %v25, %v33
    %v35 = vsub.f32 %v26, %v33
    %v36 = vmul.f32 %v34, 0.5
    %v37 = vmul.f32 %v35, 0.5
    %v38 = vperm.slane %v36, 0
    %vm39 = vcmp.ge.f32.partialorder %v36, %v38
    %vm40 = vcmp.ge.f32.partialorder %v37, %v38
    %v41 = vsel %vm39, %v36, 0.0
    %v42 = vsel %vm40, %v37, 0.0
    %v43 = vsel %vm39, 1.0, 0.0
    %v44 = vsel %vm40, 1.0, 0.0
    %v45 = vadd.f32 %v43, %v44
    %v46 = vrot.slane %v45, 4
    %v47 = vadd.f32 %v45, %v46
    %v48 = vrot.slane %v47, 2
    %v49 = vadd.f32 %v47, %v48
    %v50 = vrot.slane %v49, 1
    %v51 = vadd.f32 %v49, %v50
    %v52 = vadd.f32 %v41, %v42
    %v53 = vrot.slane %v52, 4
    %v54 = vadd.f32 %v52, %v53
    %v55 = vrot.slane %v54, 2
    %v56 = vadd.f32 %v54, %v55
    %v57 = vrot.slane %v56, 1
    %v58 = vadd.f32 %v56, %v57
    %v59 = vmul.f32 %v41, %v41
    %v60 = vmul.f32 %v42, %v42
    %v61 = vadd.f32 %v59, %v60
    %v62 = vrot.slane %v61, 4
    %v63 = vadd.f32 %v61, %v62
    %v64 = vrot.slane %v63, 2
    %v65 = vadd.f32 %v63, %v64
    %v66 = vrot.slane %v65, 1
    %v67 = vadd.f32 %v65, %v66
    %v68 = vrcp.pop %v51
    %v69 = vmul.f32 %v51, %v68
    %v70 = vsub.f32 1.0, %v69
    %v71 = vmul.f32 %v68, %v70
    %v72 = vadd.f32 %v68, %v71
    %vm73 = vweird.f32 %v51
    %vm74 = vweird.f32 %v68
    %vm75 = vmor %vm73, %vm74
    %v76 = vsel %vm75, %v68, %v72
    %v77 = vand.u32 2147483647, %v51
    %vm78 = vcmp.eq.f32.partialorder %v77, 8.507059e+37
    %v79 = vand.u32 %v51, 2147483648
    %v80 = vor.u32 1.1754944e-38, %v79
    %v81 = vsel %vm78, %v80, %v76
    %v82 = vmul.f32 1.0, %v81
    %v83 = vmul.f32 %v58, %v82
    %v84 = vmul.f32 %v67, %v82
    %v85 = vmul.f32 %v83, %v83
    %v86 = vsub.f32 %v84, %v85
    %v87 = vmul.f32 %v51, %v86
    %v88 = vsub.f32 1.0, %v87
    %v89 = vmul.f32 %v88, %v82
    %v90 = vmax.f32 %v89, 0.0
    %v91 = vrsqrt.pop %v90
    %v92 = vmul.f32 %v91, %v90
    %v93 = vmul.f32 %v92, %v91
    %v94 = vmul.f32 0.5, %v93
    %v95 = vsub.f32 1.5, %v94
    %v96 = vmul.f32 %v91, %v95
    %v97 = vmul.f32 %v90, %v96
    %vm98 = vcmp.eq.f32.partialorder %v90, inf
    %v99 = vsel %vm98, %v90, %v97
    %vm100 = vcmp.eq.f32.partialorder %v90, 0.0
    %v101 = vand.u32 %v90, 2147483648
    %v102 = vsel %vm100, %v101, %v99
    %v103 = vsub.f32 %v83, %v102
    %vm104 = vcmp.le.f32.partialorder %v103, %v36
    %vm105 = vcmp.gt.f32.partialorder %v51, 0.0
    %vm106 = vmand %vm104, %vm105
    %v107 = vsel %vm106, %v103, 0.0
    %v108 = vsel %vm106, %v51, 0.0
    %v109 = vperm.slane %v36, 1
    %vm110 = vcmp.ge.f32.partialorder %v36, %v109
    %vm111 = vcmp.ge.f32.partialorder %v37, %v109
    %v112 = vsel %vm110, %v36, 0.0
    %v113 = vsel %vm111, %v37, 0.0
    %v114 = vsel %vm110, 1.0, 0.0
    %v115 = vsel %vm111, 1.0, 0.0
    %v116 = vadd.f32 %v114, %v115
    %v117 = vrot.slane %v116, 4
    %v118 = vadd.f32 %v116, %v117
    %v119 = vrot.slane %v118, 2
    %v120 = vadd.f32 %v118, %v119
    %v121 = vrot.slane %v120, 1
    %v122 = vadd.f32 %v120, %v121
    %v123 = vadd.f32 %v112, %v113
    %v124 = vrot.slane %v123, 4
    %v125 = vadd.f32 %v123, %v124
    %v126 = vrot.slane %v125, 2
    %v127 = vadd.f32 %v125, %v126
    %v128 = vrot.slane %v127, 1
    %v129 = vadd.f32 %v127, %v128
    %v130 = vmul.f32 %v112, %v112
    %v131 = vmul.f32 %v113, %v113
    %v132 = vadd.f32 %v130, %v131
    %v133 = vrot.slane %v132, 4
    %v134 = vadd.f32 %v132, %v133
    %v135 = vrot.slane %v134, 2
    %v136 = vadd.f32 %v134, %v135
    %v137 = vrot.slane %v136, 1
    %v138 = vadd.f32 %v136, %v137
    %v139 = vrcp.pop %v122
    %v140 = vmul.f32 %v122, %v139
    %v141 = vsub.f32 1.0, %v140
    %v142 = vmul.f32 %v139, %v141
    %v143 = vadd.f32 %v139, %v142
    %vm144 = vweird.f32 %v122
    %vm145 = vweird.f32 %v139
    %vm146 = vmor %vm144, %vm145
    %v147 = vsel %vm146, %v139, %v143
    %v148 = vand.u32 2147483647, %v122
    %vm149 = vcmp.eq.f32.partialorder %v148, 8.507059e+37
    %v150 = vand.u32 %v122, 2147483648
    %v151 = vor.u32 1.1754944e-38, %v150
    %v152 = vsel %vm149, %v151, %v147
    %v153 = vmul.f32 1.0, %v152
    %v154 = vmul.f32 %v129, %v153
    %v155 = vmul.f32 %v138, %v153
    %v156 = vmul.f32 %v154, %v154
    %v157 = vsub.f32 %v155, %v156
    %v158 = vmul.f32 %v122, %v157
    %v159 = vsub.f32 1.0, %v158
    %v160 = vmul.f32 %v159, %v153
    %v161 = vmax.f32 %v160, 0.0
    %v162 = vrsqrt.pop %v161
    %v163 = vmul.f32 %v162, %v161
    %v164 = vmul.f32 %v163, %v162
    %v165 = vmul.f32 0.5, %v164
    %v166 = vsub.f32 1.5, %v165
    %v167 = vmul.f32 %v162, %v166
    %v168 = vmul.f32 %v161, %v167
    %vm169 = vcmp.eq.f32.partialorder %v161, inf
    %v170 = vsel %vm169, %v161, %v168
    %vm171 = vcmp.eq.f32.partialorder %v161, 0.0
    %v172 = vand.u32 %v161, 2147483648
    %v173 = vsel %vm171, %v172, %v170
    %v174 = vsub.f32 %v154, %v173
    %vm175 = vcmp.le.f32.partialorder %v174, %v36
    %vm176 = vcmp.gt.f32.partialorder %v122, %v108
    %v177 = vsel %vm176, 1, 0
    %v178 = vrot.slane %v177, 7
    %vm179 = vcmp.ne.s32.totalorder %v178, 0
    %vm180 = vmand %vm175, %vm179
    %v182 = vrot.slane %v107, 7
    %v184 = vsel %vm180, %v174, %v182
    %v186 = vrot.slane %v108, 7
    %v188 = vsel %vm180, %v122, %v186
    %v189 = vperm.slane %v36, 2
    %vm190 = vcmp.ge.f32.partialorder %v36, %v189
    %vm191 = vcmp.ge.f32.partialorder %v37, %v189
    %v192 = vsel %vm190, %v36, 0.0
    %v193 = vsel %vm191, %v37, 0.0
    %v194 = vsel %vm190, 1.0, 0.0
    %v195 = vsel %vm191, 1.0, 0.0
    %v196 = vadd.f32 %v194, %v195
    %v197 = vrot.slane %v196, 4
    %v198 = vadd.f32 %v196, %v197
    %v199 = vrot.slane %v198, 2
    %v200 = vadd.f32 %v198, %v199
    %v201 = vrot.slane %v200, 1
    %v202 = vadd.f32 %v200, %v201
    %v203 = vadd.f32 %v192, %v193
    %v204 = vrot.slane %v203, 4
    %v205 = vadd.f32 %v203, %v204
    %v206 = vrot.slane %v205, 2
    %v207 = vadd.f32 %v205, %v206
    %v208 = vrot.slane %v207, 1
    %v209 = vadd.f32 %v207, %v208
    %v210 = vmul.f32 %v192, %v192
    %v211 = vmul.f32 %v193, %v193
    %v212 = vadd.f32 %v210, %v211
    %v213 = vrot.slane %v212, 4
    %v214 = vadd.f32 %v212, %v213
    %v215 = vrot.slane %v214, 2
    %v216 = vadd.f32 %v214, %v215
    %v217 = vrot.slane %v216, 1
    %v218 = vadd.f32 %v216, %v217
    %v219 = vrcp.pop %v202
    %v220 = vmul.f32 %v202, %v219
    %v221 = vsub.f32 1.0, %v220
    %v222 = vmul.f32 %v219, %v221
    %v223 = vadd.f32 %v219, %v222
    %vm224 = vweird.f32 %v202
    %vm225 = vweird.f32 %v219
    %vm226 = vmor %vm224, %vm225
    %v227 = vsel %vm226, %v219, %v223
    %v228 = vand.u32 2147483647, %v202
    %vm229 = vcmp.eq.f32.partialorder %v228, 8.507059e+37
    %v230 = vand.u32 %v202, 2147483648
    %v231 = vor.u32 1.1754944e-38, %v230
    %v232 = vsel %vm229, %v231, %v227
    %v233 = vmul.f32 1.0, %v232
    %v234 = vmul.f32 %v209, %v233
    %v235 = vmul.f32 %v218, %v233
    %v236 = vmul.f32 %v234, %v234
    %v237 = vsub.f32 %v235, %v236
    %v238 = vmul.f32 %v202, %v237
    %v239 = vsub.f32 1.0, %v238
    %v240 = vmul.f32 %v239, %v233
    %v241 = vmax.f32 %v240, 0.0
    %v242 = vrsqrt.pop %v241
    %v243 = vmul.f32 %v242, %v241
    %v244 = vmul.f32 %v243, %v242
    %v245 = vmul.f32 0.5, %v244
    %v246 = vsub.f32 1.5, %v245
    %v247 = vmul.f32 %v242, %v246
    %v248 = vmul.f32 %v241, %v247
    %vm249 = vcmp.eq.f32.partialorder %v241, inf
    %v250 = vsel %vm249, %v241, %v248
    %vm251 = vcmp.eq.f32.partialorder %v241, 0.0
    %v252 = vand.u32 %v241, 2147483648
    %v253 = vsel %vm251, %v252, %v250
    %v254 = vsub.f32 %v234, %v253
    %vm255 = vcmp.le.f32.partialorder %v254, %v36
    %vm256 = vcmp.gt.f32.partialorder %v202, %v188
    %v257 = vsel %vm256, 1, 0
    %v258 = vrot.slane %v257, 7
    %vm259 = vcmp.ne.s32.totalorder %v258, 0
    %vm260 = vmand %vm255, %vm259
    %v262 = vrot.slane %v184, 7
    %v264 = vsel %vm260, %v254, %v262
    %v266 = vrot.slane %v188, 7
    %v268 = vsel %vm260, %v202, %v266
    %v269 = vperm.slane %v36, 3
    %vm270 = vcmp.ge.f32.partialorder %v36, %v269
    %vm271 = vcmp.ge.f32.partialorder %v37, %v269
    %v272 = vsel %vm270, %v36, 0.0
    %v273 = vsel %vm271, %v37, 0.0
    %v274 = vsel %vm270, 1.0, 0.0
    %v275 = vsel %vm271, 1.0, 0.0
    %v276 = vadd.f32 %v274, %v275
    %v277 = vrot.slane %v276, 4
    %v278 = vadd.f32 %v276, %v277
    %v279 = vrot.slane %v278, 2
    %v280 = vadd.f32 %v278, %v279
    %v281 = vrot.slane %v280, 1
    %v282 = vadd.f32 %v280, %v281
    %v283 = vadd.f32 %v272, %v273
    %v284 = vrot.slane %v283, 4
    %v285 = vadd.f32 %v283, %v284
    %v286 = vrot.slane %v285, 2
    %v287 = vadd.f32 %v285, %v286
    %v288 = vrot.slane %v287, 1
    %v289 = vadd.f32 %v287, %v288
    %v290 = vmul.f32 %v272, %v272
    %v291 = vmul.f32 %v273, %v273
    %v292 = vadd.f32 %v290, %v291
    %v293 = vrot.slane %v292, 4
    %v294 = vadd.f32 %v292, %v293
    %v295 = vrot.slane %v294, 2
    %v296 = vadd.f32 %v294, %v295
    %v297 = vrot.slane %v296, 1
    %v298 = vadd.f32 %v296, %v297
    %v299 = vrcp.pop %v282
    %v300 = vmul.f32 %v282, %v299
    %v301 = vsub.f32 1.0, %v300
    %v302 = vmul.f32 %v299, %v301
    %v303 = vadd.f32 %v299, %v302
    %vm304 = vweird.f32 %v282
    %vm305 = vweird.f32 %v299
    %vm306 = vmor %vm304, %vm305
    %v307 = vsel %vm306, %v299, %v303
    %v308 = vand.u32 2147483647, %v282
    %vm309 = vcmp.eq.f32.partialorder %v308, 8.507059e+37
    %v310 = vand.u32 %v282, 2147483648
    %v311 = vor.u32 1.1754944e-38, %v310
    %v312 = vsel %vm309, %v311, %v307
    %v313 = vmul.f32 1.0, %v312
    %v314 = vmul.f32 %v289, %v313
    %v315 = vmul.f32 %v298, %v313
    %v316 = vmul.f32 %v314, %v314
    %v317 = vsub.f32 %v315, %v316
    %v318 = vmul.f32 %v282, %v317
    %v319 = vsub.f32 1.0, %v318
    %v320 = vmul.f32 %v319, %v313
    %v321 = vmax.f32 %v320, 0.0
    %v322 = vrsqrt.pop %v321
    %v323 = vmul.f32 %v322, %v321
    %v324 = vmul.f32 %v323, %v322
    %v325 = vmul.f32 0.5, %v324
    %v326 = vsub.f32 1.5, %v325
    %v327 = vmul.f32 %v322, %v326
    %v328 = vmul.f32 %v321, %v327
    %vm329 = vcmp.eq.f32.partialorder %v321, inf
    %v330 = vsel %vm329, %v321, %v328
    %vm331 = vcmp.eq.f32.partialorder %v321, 0.0
    %v332 = vand.u32 %v321, 2147483648
    %v333 = vsel %vm331, %v332, %v330
    %v334 = vsub.f32 %v314, %v333
    %vm335 = vcmp.le.f32.partialorder %v334, %v36
    %vm336 = vcmp.gt.f32.partialorder %v282, %v268
    %v337 = vsel %vm336, 1, 0
    %v338 = vrot.slane %v337, 7
    %vm339 = vcmp.ne.s32.totalorder %v338, 0
    %vm340 = vmand %vm335, %vm339
    %v342 = vrot.slane %v264, 7
    %v344 = vsel %vm340, %v334, %v342
    %v346 = vrot.slane %v268, 7
    %v348 = vsel %vm340, %v282, %v346
    %v349 = vperm.slane %v36, 4
    %vm350 = vcmp.ge.f32.partialorder %v36, %v349
    %vm351 = vcmp.ge.f32.partialorder %v37, %v349
    %v352 = vsel %vm350, %v36, 0.0
    %v353 = vsel %vm351, %v37, 0.0
    %v354 = vsel %vm350, 1.0, 0.0
    %v355 = vsel %vm351, 1.0, 0.0
    %v356 = vadd.f32 %v354, %v355
    %v357 = vrot.slane %v356, 4
    %v358 = vadd.f32 %v356, %v357
    %v359 = vrot.slane %v358, 2
    %v360 = vadd.f32 %v358, %v359
    %v361 = vrot.slane %v360, 1
    %v362 = vadd.f32 %v360, %v361
    %v363 = vadd.f32 %v352, %v353
    %v364 = vrot.slane %v363, 4
    %v365 = vadd.f32 %v363, %v364
    %v366 = vrot.slane %v365, 2
    %v367 = vadd.f32 %v365, %v366
    %v368 = vrot.slane %v367, 1
    %v369 = vadd.f32 %v367, %v368
    %v370 = vmul.f32 %v352, %v352
    %v371 = vmul.f32 %v353, %v353
    %v372 = vadd.f32 %v370, %v371
    %v373 = vrot.slane %v372, 4
    %v374 = vadd.f32 %v372, %v373
    %v375 = vrot.slane %v374, 2
    %v376 = vadd.f32 %v374, %v375
    %v377 = vrot.slane %v376, 1
    %v378 = vadd.f32 %v376, %v377
    %v379 = vrcp.pop %v362
    %v380 = vmul.f32 %v362, %v379
    %v381 = vsub.f32 1.0, %v380
    %v382 = vmul.f32 %v379, %v381
    %v383 = vadd.f32 %v379, %v382
    %vm384 = vweird.f32 %v362
    %vm385 = vweird.f32 %v379
    %vm386 = vmor %vm384, %vm385
    %v387 = vsel %vm386, %v379, %v383
    %v388 = vand.u32 2147483647, %v362
    %vm389 = vcmp.eq.f32.partialorder %v388, 8.507059e+37
    %v390 = vand.u32 %v362, 2147483648
    %v391 = vor.u32 1.1754944e-38, %v390
    %v392 = vsel %vm389, %v391, %v387
    %v393 = vmul.f32 1.0, %v392
    %v394 = vmul.f32 %v369, %v393
    %v395 = vmul.f32 %v378, %v393
    %v396 = vmul.f32 %v394, %v394
    %v397 = vsub.f32 %v395, %v396
    %v398 = vmul.f32 %v362, %v397
    %v399 = vsub.f32 1.0, %v398
    %v400 = vmul.f32 %v399, %v393
    %v401 = vmax.f32 %v400, 0.0
    %v402 = vrsqrt.pop %v401
    %v403 = vmul.f32 %v402, %v401
    %v404 = vmul.f32 %v403, %v402
    %v405 = vmul.f32 0.5, %v404
    %v406 = vsub.f32 1.5, %v405
    %v407 = vmul.f32 %v402, %v406
    %v408 = vmul.f32 %v401, %v407
    %vm409 = vcmp.eq.f32.partialorder %v401, inf
    %v410 = vsel %vm409, %v401, %v408
    %vm411 = vcmp.eq.f32.partialorder %v401, 0.0
    %v412 = vand.u32 %v401, 2147483648
    %v413 = vsel %vm411, %v412, %v410
    %v414 = vsub.f32 %v394, %v413
    %vm415 = vcmp.le.f32.partialorder %v414, %v36
    %vm416 = vcmp.gt.f32.partialorder %v362, %v348
    %v417 = vsel %vm416, 1, 0
    %v418 = vrot.slane %v417, 7
    %vm419 = vcmp.ne.s32.totalorder %v418, 0
    %vm420 = vmand %vm415, %vm419
    %v422 = vrot.slane %v344, 7
    %v424 = vsel %vm420, %v414, %v422
    %v426 = vrot.slane %v348, 7
    %v428 = vsel %vm420, %v362, %v426
    %v429 = vperm.slane %v36, 5
    %vm430 = vcmp.ge.f32.partialorder %v36, %v429
    %vm431 = vcmp.ge.f32.partialorder %v37, %v429
    %v432 = vsel %vm430, %v36, 0.0
    %v433 = vsel %vm431, %v37, 0.0
    %v434 = vsel %vm430, 1.0, 0.0
    %v435 = vsel %vm431, 1.0, 0.0
    %v436 = vadd.f32 %v434, %v435
    %v437 = vrot.slane %v436, 4
    %v438 = vadd.f32 %v436, %v437
    %v439 = vrot.slane %v438, 2
    %v440 = vadd.f32 %v438, %v439
    %v441 = vrot.slane %v440, 1
    %v442 = vadd.f32 %v440, %v441
    %v443 = vadd.f32 %v432, %v433
    %v444 = vrot.slane %v443, 4
    %v445 = vadd.f32 %v443, %v444
    %v446 = vrot.slane %v445, 2
    %v447 = vadd.f32 %v445, %v446
    %v448 = vrot.slane %v447, 1
    %v449 = vadd.f32 %v447, %v448
    %v450 = vmul.f32 %v432, %v432
    %v451 = vmul.f32 %v433, %v433
    %v452 = vadd.f32 %v450, %v451
    %v453 = vrot.slane %v452, 4
    %v454 = vadd.f32 %v452, %v453
    %v455 = vrot.slane %v454, 2
    %v456 = vadd.f32 %v454, %v455
    %v457 = vrot.slane %v456, 1
    %v458 = vadd.f32 %v456, %v457
    %v459 = vrcp.pop %v442
    %v460 = vmul.f32 %v442, %v459
    %v461 = vsub.f32 1.0, %v460
    %v462 = vmul.f32 %v459, %v461
    %v463 = vadd.f32 %v459, %v462
    %vm464 = vweird.f32 %v442
    %vm465 = vweird.f32 %v459
    %vm466 = vmor %vm464, %vm465
    %v467 = vsel %vm466, %v459, %v463
    %v468 = vand.u32 2147483647, %v442
    %vm469 = vcmp.eq.f32.partialorder %v468, 8.507059e+37
    %v470 = vand.u32 %v442, 2147483648
    %v471 = vor.u32 1.1754944e-38, %v470
    %v472 = vsel %vm469, %v471, %v467
    %v473 = vmul.f32 1.0, %v472
    %v474 = vmul.f32 %v449, %v473
    %v475 = vmul.f32 %v458, %v473
    %v476 = vmul.f32 %v474, %v474
    %v477 = vsub.f32 %v475, %v476
    %v478 = vmul.f32 %v442, %v477
    %v479 = vsub.f32 1.0, %v478
    %v480 = vmul.f32 %v479, %v473
    %v481 = vmax.f32 %v480, 0.0
    %v482 = vrsqrt.pop %v481
    %v483 = vmul.f32 %v482, %v481
    %v484 = vmul.f32 %v483, %v482
    %v485 = vmul.f32 0.5, %v484
    %v486 = vsub.f32 1.5, %v485
    %v487 = vmul.f32 %v482, %v486
    %v488 = vmul.f32 %v481, %v487
    %vm489 = vcmp.eq.f32.partialorder %v481, inf
    %v490 = vsel %vm489, %v481, %v488
    %vm491 = vcmp.eq.f32.partialorder %v481, 0.0
    %v492 = vand.u32 %v481, 2147483648
    %v493 = vsel %vm491, %v492, %v490
    %v494 = vsub.f32 %v474, %v493
    %vm495 = vcmp.le.f32.partialorder %v494, %v36
    %vm496 = vcmp.gt.f32.partialorder %v442, %v428
    %v497 = vsel %vm496, 1, 0
    %v498 = vrot.slane %v497, 7
    %vm499 = vcmp.ne.s32.totalorder %v498, 0
    %vm500 = vmand %vm495, %vm499
    %v502 = vrot.slane %v424, 7
    %v504 = vsel %vm500, %v494, %v502
    %v506 = vrot.slane %v428, 7
    %v508 = vsel %vm500, %v442, %v506
    %v509 = vperm.slane %v36, 6
    %vm510 = vcmp.ge.f32.partialorder %v36, %v509
    %vm511 = vcmp.ge.f32.partialorder %v37, %v509
    %v512 = vsel %vm510, %v36, 0.0
    %v513 = vsel %vm511, %v37, 0.0
    %v514 = vsel %vm510, 1.0, 0.0
    %v515 = vsel %vm511, 1.0, 0.0
    %v516 = vadd.f32 %v514, %v515
    %v517 = vrot.slane %v516, 4
    %v518 = vadd.f32 %v516, %v517
    %v519 = vrot.slane %v518, 2
    %v520 = vadd.f32 %v518, %v519
    %v521 = vrot.slane %v520, 1
    %v522 = vadd.f32 %v520, %v521
    %v523 = vadd.f32 %v512, %v513
    %v524 = vrot.slane %v523, 4
    %v525 = vadd.f32 %v523, %v524
    %v526 = vrot.slane %v525, 2
    %v527 = vadd.f32 %v525, %v526
    %v528 = vrot.slane %v527, 1
    %v529 = vadd.f32 %v527, %v528
    %v530 = vmul.f32 %v512, %v512
    %v531 = vmul.f32 %v513, %v513
    %v532 = vadd.f32 %v530, %v531
    %v533 = vrot.slane %v532, 4
    %v534 = vadd.f32 %v532, %v533
    %v535 = vrot.slane %v534, 2
    %v536 = vadd.f32 %v534, %v535
    %v537 = vrot.slane %v536, 1
    %v538 = vadd.f32 %v536, %v537
    %v539 = vrcp.pop %v522
    %v540 = vmul.f32 %v522, %v539
    %v541 = vsub.f32 1.0, %v540
    %v542 = vmul.f32 %v539, %v541
    %v543 = vadd.f32 %v539, %v542
    %vm544 = vweird.f32 %v522
    %vm545 = vweird.f32 %v539
    %vm546 = vmor %vm544, %vm545
    %v547 = vsel %vm546, %v539, %v543
    %v548 = vand.u32 2147483647, %v522
    %vm549 = vcmp.eq.f32.partialorder %v548, 8.507059e+37
    %v550 = vand.u32 %v522, 2147483648
    %v551 = vor.u32 1.1754944e-38, %v550
    %v552 = vsel %vm549, %v551, %v547
    %v553 = vmul.f32 1.0, %v552
    %v554 = vmul.f32 %v529, %v553
    %v555 = vmul.f32 %v538, %v553
    %v556 = vmul.f32 %v554, %v554
    %v557 = vsub.f32 %v555, %v556
    %v558 = vmul.f32 %v522, %v557
    %v559 = vsub.f32 1.0, %v558
    %v560 = vmul.f32 %v559, %v553
    %v561 = vmax.f32 %v560, 0.0
    %v562 = vrsqrt.pop %v561
    %v563 = vmul.f32 %v562, %v561
    %v564 = vmul.f32 %v563, %v562
    %v565 = vmul.f32 0.5, %v564
    %v566 = vsub.f32 1.5, %v565
    %v567 = vmul.f32 %v562, %v566
    %v568 = vmul.f32 %v561, %v567
    %vm569 = vcmp.eq.f32.partialorder %v561, inf
    %v570 = vsel %vm569, %v561, %v568
    %vm571 = vcmp.eq.f32.partialorder %v561, 0.0
    %v572 = vand.u32 %v561, 2147483648
    %v573 = vsel %vm571, %v572, %v570
    %v574 = vsub.f32 %v554, %v573
    %vm575 = vcmp.le.f32.partialorder %v574, %v36
    %vm576 = vcmp.gt.f32.partialorder %v522, %v508
    %v577 = vsel %vm576, 1, 0
    %v578 = vrot.slane %v577, 7
    %vm579 = vcmp.ne.s32.totalorder %v578, 0
    %vm580 = vmand %vm575, %vm579
    %v582 = vrot.slane %v504, 7
    %v584 = vsel %vm580, %v574, %v582
    %v586 = vrot.slane %v508, 7
    %v588 = vsel %vm580, %v522, %v586
    %v589 = vperm.slane %v36, 7
    %vm590 = vcmp.ge.f32.partialorder %v36, %v589
    %vm591 = vcmp.ge.f32.partialorder %v37, %v589
    %v592 = vsel %vm590, %v36, 0.0
    %v593 = vsel %vm591, %v37, 0.0
    %v594 = vsel %vm590, 1.0, 0.0
    %v595 = vsel %vm591, 1.0, 0.0
    %v596 = vadd.f32 %v594, %v595
    %v597 = vrot.slane %v596, 4
    %v598 = vadd.f32 %v596, %v597
    %v599 = vrot.slane %v598, 2
    %v600 = vadd.f32 %v598, %v599
    %v601 = vrot.slane %v600, 1
    %v602 = vadd.f32 %v600, %v601
    %v603 = vadd.f32 %v592, %v593
    %v604 = vrot.slane %v603, 4
    %v605 = vadd.f32 %v603, %v604
    %v606 = vrot.slane %v605, 2
    %v607 = vadd.f32 %v605, %v606
    %v608 = vrot.slane %v607, 1
    %v609 = vadd.f32 %v607, %v608
    %v610 = vmul.f32 %v592, %v592
    %v611 = vmul.f32 %v593, %v593
    %v612 = vadd.f32 %v610, %v611
    %v613 = vrot.slane %v612, 4
    %v614 = vadd.f32 %v612, %v613
    %v615 = vrot.slane %v614, 2
    %v616 = vadd.f32 %v614, %v615
    %v617 = vrot.slane %v616, 1
    %v618 = vadd.f32 %v616, %v617
    %v619 = vrcp.pop %v602
    %v620 = vmul.f32 %v602, %v619
    %v621 = vsub.f32 1.0, %v620
    %v622 = vmul.f32 %v619, %v621
    %v623 = vadd.f32 %v619, %v622
    %vm624 = vweird.f32 %v602
    %vm625 = vweird.f32 %v619
    %vm626 = vmor %vm624, %vm625
    %v627 = vsel %vm626, %v619, %v623
    %v628 = vand.u32 2147483647, %v602
    %vm629 = vcmp.eq.f32.partialorder %v628, 8.507059e+37
    %v630 = vand.u32 %v602, 2147483648
    %v631 = vor.u32 1.1754944e-38, %v630
    %v632 = vsel %vm629, %v631, %v627
    %v633 = vmul.f32 1.0, %v632
    %v634 = vmul.f32 %v609, %v633
    %v635 = vmul.f32 %v618, %v633
    %v636 = vmul.f32 %v634, %v634
    %v637 = vsub.f32 %v635, %v636
    %v638 = vmul.f32 %v602, %v637
    %v639 = vsub.f32 1.0, %v638
    %v640 = vmul.f32 %v639, %v633
    %v641 = vmax.f32 %v640, 0.0
    %v642 = vrsqrt.pop %v641
    %v643 = vmul.f32 %v642, %v641
    %v644 = vmul.f32 %v643, %v642
    %v645 = vmul.f32 0.5, %v644
    %v646 = vsub.f32 1.5, %v645
    %v647 = vmul.f32 %v642, %v646
    %v648 = vmul.f32 %v641, %v647
    %vm649 = vcmp.eq.f32.partialorder %v641, inf
    %v650 = vsel %vm649, %v641, %v648
    %vm651 = vcmp.eq.f32.partialorder %v641, 0.0
    %v652 = vand.u32 %v641, 2147483648
    %v653 = vsel %vm651, %v652, %v650
    %v654 = vsub.f32 %v634, %v653
    %vm655 = vcmp.le.f32.partialorder %v654, %v36
    %vm656 = vcmp.gt.f32.partialorder %v602, %v588
    %v657 = vsel %vm656, 1, 0
    %v658 = vrot.slane %v657, 7
    %vm659 = vcmp.ne.s32.totalorder %v658, 0
    %vm660 = vmand %vm655, %vm659
    %v662 = vrot.slane %v584, 7
    %v664 = vsel %vm660, %v654, %v662
    %v666 = vrot.slane %v588, 7
    %v668 = vsel %vm660, %v602, %v666
    %v669 = vperm.slane %v37, 0
    %vm670 = vcmp.ge.f32.partialorder %v36, %v669
    %vm671 = vcmp.ge.f32.partialorder %v37, %v669
    %v672 = vsel %vm670, %v36, 0.0
    %v673 = vsel %vm671, %v37, 0.0
    %v674 = vsel %vm670, 1.0, 0.0
    %v675 = vsel %vm671, 1.0, 0.0
    %v676 = vadd.f32 %v674, %v675
    %v677 = vrot.slane %v676, 4
    %v678 = vadd.f32 %v676, %v677
    %v679 = vrot.slane %v678, 2
    %v680 = vadd.f32 %v678, %v679
    %v681 = vrot.slane %v680, 1
    %v682 = vadd.f32 %v680, %v681
    %v683 = vadd.f32 %v672, %v673
    %v684 = vrot.slane %v683, 4
    %v685 = vadd.f32 %v683, %v684
    %v686 = vrot.slane %v685, 2
    %v687 = vadd.f32 %v685, %v686
    %v688 = vrot.slane %v687, 1
    %v689 = vadd.f32 %v687, %v688
    %v690 = vmul.f32 %v672, %v672
    %v691 = vmul.f32 %v673, %v673
    %v692 = vadd.f32 %v690, %v691
    %v693 = vrot.slane %v692, 4
    %v694 = vadd.f32 %v692, %v693
    %v695 = vrot.slane %v694, 2
    %v696 = vadd.f32 %v694, %v695
    %v697 = vrot.slane %v696, 1
    %v698 = vadd.f32 %v696, %v697
    %v699 = vrcp.pop %v682
    %v700 = vmul.f32 %v682, %v699
    %v701 = vsub.f32 1.0, %v700
    %v702 = vmul.f32 %v699, %v701
    %v703 = vadd.f32 %v699, %v702
    %vm704 = vweird.f32 %v682
    %vm705 = vweird.f32 %v699
    %vm706 = vmor %vm704, %vm705
    %v707 = vsel %vm706, %v699, %v703
    %v708 = vand.u32 2147483647, %v682
    %vm709 = vcmp.eq.f32.partialorder %v708, 8.507059e+37
    %v710 = vand.u32 %v682, 2147483648
    %v711 = vor.u32 1.1754944e-38, %v710
    %v712 = vsel %vm709, %v711, %v707
    %v713 = vmul.f32 1.0, %v712
    %v714 = vmul.f32 %v689, %v713
    %v715 = vmul.f32 %v698, %v713
    %v716 = vmul.f32 %v714, %v714
    %v717 = vsub.f32 %v715, %v716
    %v718 = vmul.f32 %v682, %v717
    %v719 = vsub.f32 1.0, %v718
    %v720 = vmul.f32 %v719, %v713
    %v721 = vmax.f32 %v720, 0.0
    %v722 = vrsqrt.pop %v721
    %v723 = vmul.f32 %v722, %v721
    %v724 = vmul.f32 %v723, %v722
    %v725 = vmul.f32 0.5, %v724
    %v726 = vsub.f32 1.5, %v725
    %v727 = vmul.f32 %v722, %v726
    %v728 = vmul.f32 %v721, %v727
    %vm729 = vcmp.eq.f32.partialorder %v721, inf
    %v730 = vsel %vm729, %v721, %v728
    %vm731 = vcmp.eq.f32.partialorder %v721, 0.0
    %v732 = vand.u32 %v721, 2147483648
    %v733 = vsel %vm731, %v732, %v730
    %v734 = vsub.f32 %v714, %v733
    %vm735 = vcmp.le.f32.partialorder %v734, %v37
    %vm736 = vcmp.gt.f32.partialorder %v682, %v668
    %v737 = vsel %vm736, 1, 0
    %v738 = vrot.slane %v737, 7
    %vm739 = vcmp.ne.s32.totalorder %v738, 0
    %vm740 = vmand %vm735, %vm739
    %v742 = vrot.slane %v664, 7
    %v744 = vsel %vm740, %v734, %v742
    %v746 = vrot.slane %v668, 7
    %v748 = vsel %vm740, %v682, %v746
    %v749 = vperm.slane %v37, 1
    %vm750 = vcmp.ge.f32.partialorder %v36, %v749
    %vm751 = vcmp.ge.f32.partialorder %v37, %v749
    %v752 = vsel %vm750, %v36, 0.0
    %v753 = vsel %vm751, %v37, 0.0
    %v754 = vsel %vm750, 1.0, 0.0
    %v755 = vsel %vm751, 1.0, 0.0
    %v756 = vadd.f32 %v754, %v755
    %v757 = vrot.slane %v756, 4
    %v758 = vadd.f32 %v756, %v757
    %v759 = vrot.slane %v758, 2
    %v760 = vadd.f32 %v758, %v759
    %v761 = vrot.slane %v760, 1
    %v762 = vadd.f32 %v760, %v761
    %v763 = vadd.f32 %v752, %v753
    %v764 = vrot.slane %v763, 4
    %v765 = vadd.f32 %v763, %v764
    %v766 = vrot.slane %v765, 2
    %v767 = vadd.f32 %v765, %v766
    %v768 = vrot.slane %v767, 1
    %v769 = vadd.f32 %v767, %v768
    %v770 = vmul.f32 %v752, %v752
    %v771 = vmul.f32 %v753, %v753
    %v772 = vadd.f32 %v770, %v771
    %v773 = vrot.slane %v772, 4
    %v774 = vadd.f32 %v772, %v773
    %v775 = vrot.slane %v774, 2
    %v776 = vadd.f32 %v774, %v775
    %v777 = vrot.slane %v776, 1
    %v778 = vadd.f32 %v776, %v777
    %v779 = vrcp.pop %v762
    %v780 = vmul.f32 %v762, %v779
    %v781 = vsub.f32 1.0, %v780
    %v782 = vmul.f32 %v779, %v781
    %v783 = vadd.f32 %v779, %v782
    %vm784 = vweird.f32 %v762
    %vm785 = vweird.f32 %v779
    %vm786 = vmor %vm784, %vm785
    %v787 = vsel %vm786, %v779, %v783
    %v788 = vand.u32 2147483647, %v762
    %vm789 = vcmp.eq.f32.partialorder %v788, 8.507059e+37
    %v790 = vand.u32 %v762, 2147483648
    %v791 = vor.u32 1.1754944e-38, %v790
    %v792 = vsel %vm789, %v791, %v787
    %v793 = vmul.f32 1.0, %v792
    %v794 = vmul.f32 %v769, %v793
    %v795 = vmul.f32 %v778, %v793
    %v796 = vmul.f32 %v794, %v794
    %v797 = vsub.f32 %v795, %v796
    %v798 = vmul.f32 %v762, %v797
    %v799 = vsub.f32 1.0, %v798
    %v800 = vmul.f32 %v799, %v793
    %v801 = vmax.f32 %v800, 0.0
    %v802 = vrsqrt.pop %v801
    %v803 = vmul.f32 %v802, %v801
    %v804 = vmul.f32 %v803, %v802
    %v805 = vmul.f32 0.5, %v804
    %v806 = vsub.f32 1.5, %v805
    %v807 = vmul.f32 %v802, %v806
    %v808 = vmul.f32 %v801, %v807
    %vm809 = vcmp.eq.f32.partialorder %v801, inf
    %v810 = vsel %vm809, %v801, %v808
    %vm811 = vcmp.eq.f32.partialorder %v801, 0.0
    %v812 = vand.u32 %v801, 2147483648
    %v813 = vsel %vm811, %v812, %v810
    %v814 = vsub.f32 %v794, %v813
    %vm815 = vcmp.le.f32.partialorder %v814, %v37
    %vm816 = vcmp.gt.f32.partialorder %v762, %v748
    %v817 = vsel %vm816, 1, 0
    %v818 = vrot.slane %v817, 7
    %vm819 = vcmp.ne.s32.totalorder %v818, 0
    %vm820 = vmand %vm815, %vm819
    %v822 = vrot.slane %v744, 7
    %v824 = vsel %vm820, %v814, %v822
    %v826 = vrot.slane %v748, 7
    %v828 = vsel %vm820, %v762, %v826
    %v829 = vperm.slane %v37, 2
    %vm830 = vcmp.ge.f32.partialorder %v36, %v829
    %vm831 = vcmp.ge.f32.partialorder %v37, %v829
    %v832 = vsel %vm830, %v36, 0.0
    %v833 = vsel %vm831, %v37, 0.0
    %v834 = vsel %vm830, 1.0, 0.0
    %v835 = vsel %vm831, 1.0, 0.0
    %v836 = vadd.f32 %v834, %v835
    %v837 = vrot.slane %v836, 4
    %v838 = vadd.f32 %v836, %v837
    %v839 = vrot.slane %v838, 2
    %v840 = vadd.f32 %v838, %v839
    %v841 = vrot.slane %v840, 1
    %v842 = vadd.f32 %v840, %v841
    %v843 = vadd.f32 %v832, %v833
    %v844 = vrot.slane %v843, 4
    %v845 = vadd.f32 %v843, %v844
    %v846 = vrot.slane %v845, 2
    %v847 = vadd.f32 %v845, %v846
    %v848 = vrot.slane %v847, 1
    %v849 = vadd.f32 %v847, %v848
    %v850 = vmul.f32 %v832, %v832
    %v851 = vmul.f32 %v833, %v833
    %v852 = vadd.f32 %v850, %v851
    %v853 = vrot.slane %v852, 4
    %v854 = vadd.f32 %v852, %v853
    %v855 = vrot.slane %v854, 2
    %v856 = vadd.f32 %v854, %v855
    %v857 = vrot.slane %v856, 1
    %v858 = vadd.f32 %v856, %v857
    %v859 = vrcp.pop %v842
    %v860 = vmul.f32 %v842, %v859
    %v861 = vsub.f32 1.0, %v860
    %v862 = vmul.f32 %v859, %v861
    %v863 = vadd.f32 %v859, %v862
    %vm864 = vweird.f32 %v842
    %vm865 = vweird.f32 %v859
    %vm866 = vmor %vm864, %vm865
    %v867 = vsel %vm866, %v859, %v863
    %v868 = vand.u32 2147483647, %v842
    %vm869 = vcmp.eq.f32.partialorder %v868, 8.507059e+37
    %v870 = vand.u32 %v842, 2147483648
    %v871 = vor.u32 1.1754944e-38, %v870
    %v872 = vsel %vm869, %v871, %v867
    %v873 = vmul.f32 1.0, %v872
    %v874 = vmul.f32 %v849, %v873
    %v875 = vmul.f32 %v858, %v873
    %v876 = vmul.f32 %v874, %v874
    %v877 = vsub.f32 %v875, %v876
    %v878 = vmul.f32 %v842, %v877
    %v879 = vsub.f32 1.0, %v878
    %v880 = vmul.f32 %v879, %v873
    %v881 = vmax.f32 %v880, 0.0
    %v882 = vrsqrt.pop %v881
    %v883 = vmul.f32 %v882, %v881
    %v884 = vmul.f32 %v883, %v882
    %v885 = vmul.f32 0.5, %v884
    %v886 = vsub.f32 1.5, %v885
    %v887 = vmul.f32 %v882, %v886
    %v888 = vmul.f32 %v881, %v887
    %vm889 = vcmp.eq.f32.partialorder %v881, inf
    %v890 = vsel %vm889, %v881, %v888
    %vm891 = vcmp.eq.f32.partialorder %v881, 0.0
    %v892 = vand.u32 %v881, 2147483648
    %v893 = vsel %vm891, %v892, %v890
    %v894 = vsub.f32 %v874, %v893
    %vm895 = vcmp.le.f32.partialorder %v894, %v37
    %vm896 = vcmp.gt.f32.partialorder %v842, %v828
    %v897 = vsel %vm896, 1, 0
    %v898 = vrot.slane %v897, 7
    %vm899 = vcmp.ne.s32.totalorder %v898, 0
    %vm900 = vmand %vm895, %vm899
    %v902 = vrot.slane %v824, 7
    %v904 = vsel %vm900, %v894, %v902
    %v906 = vrot.slane %v828, 7
    %v908 = vsel %vm900, %v842, %v906
    %v909 = vperm.slane %v37, 3
    %vm910 = vcmp.ge.f32.partialorder %v36, %v909
    %vm911 = vcmp.ge.f32.partialorder %v37, %v909
    %v912 = vsel %vm910, %v36, 0.0
    %v913 = vsel %vm911, %v37, 0.0
    %v914 = vsel %vm910, 1.0, 0.0
    %v915 = vsel %vm911, 1.0, 0.0
    %v916 = vadd.f32 %v914, %v915
    %v917 = vrot.slane %v916, 4
    %v918 = vadd.f32 %v916, %v917
    %v919 = vrot.slane %v918, 2
    %v920 = vadd.f32 %v918, %v919
    %v921 = vrot.slane %v920, 1
    %v922 = vadd.f32 %v920, %v921
    %v923 = vadd.f32 %v912, %v913
    %v924 = vrot.slane %v923, 4
    %v925 = vadd.f32 %v923, %v924
    %v926 = vrot.slane %v925, 2
    %v927 = vadd.f32 %v925, %v926
    %v928 = vrot.slane %v927, 1
    %v929 = vadd.f32 %v927, %v928
    %v930 = vmul.f32 %v912, %v912
    %v931 = vmul.f32 %v913, %v913
    %v932 = vadd.f32 %v930, %v931
    %v933 = vrot.slane %v932, 4
    %v934 = vadd.f32 %v932, %v933
    %v935 = vrot.slane %v934, 2
    %v936 = vadd.f32 %v934, %v935
    %v937 = vrot.slane %v936, 1
    %v938 = vadd.f32 %v936, %v937
    %v939 = vrcp.pop %v922
    %v940 = vmul.f32 %v922, %v939
    %v941 = vsub.f32 1.0, %v940
    %v942 = vmul.f32 %v939, %v941
    %v943 = vadd.f32 %v939, %v942
    %vm944 = vweird.f32 %v922
    %vm945 = vweird.f32 %v939
    %vm946 = vmor %vm944, %vm945
    %v947 = vsel %vm946, %v939, %v943
    %v948 = vand.u32 2147483647, %v922
    %vm949 = vcmp.eq.f32.partialorder %v948, 8.507059e+37
    %v950 = vand.u32 %v922, 2147483648
    %v951 = vor.u32 1.1754944e-38, %v950
    %v952 = vsel %vm949, %v951, %v947
    %v953 = vmul.f32 1.0, %v952
    %v954 = vmul.f32 %v929, %v953
    %v955 = vmul.f32 %v938, %v953
    %v956 = vmul.f32 %v954, %v954
    %v957 = vsub.f32 %v955, %v956
    %v958 = vmul.f32 %v922, %v957
    %v959 = vsub.f32 1.0, %v958
    %v960 = vmul.f32 %v959, %v953
    %v961 = vmax.f32 %v960, 0.0
    %v962 = vrsqrt.pop %v961
    %v963 = vmul.f32 %v962, %v961
    %v964 = vmul.f32 %v963, %v962
    %v965 = vmul.f32 0.5, %v964
    %v966 = vsub.f32 1.5, %v965
    %v967 = vmul.f32 %v962, %v966
    %v968 = vmul.f32 %v961, %v967
    %vm969 = vcmp.eq.f32.partialorder %v961, inf
    %v970 = vsel %vm969, %v961, %v968
    %vm971 = vcmp.eq.f32.partialorder %v961, 0.0
    %v972 = vand.u32 %v961, 2147483648
    %v973 = vsel %vm971, %v972, %v970
    %v974 = vsub.f32 %v954, %v973
    %vm975 = vcmp.le.f32.partialorder %v974, %v37
    %vm976 = vcmp.gt.f32.partialorder %v922, %v908
    %v977 = vsel %vm976, 1, 0
    %v978 = vrot.slane %v977, 7
    %vm979 = vcmp.ne.s32.totalorder %v978, 0
    %vm980 = vmand %vm975, %vm979
    %v982 = vrot.slane %v904, 7
    %v984 = vsel %vm980, %v974, %v982
    %v986 = vrot.slane %v908, 7
    %v988 = vsel %vm980, %v922, %v986
    %v989 = vperm.slane %v37, 4
    %vm990 = vcmp.ge.f32.partialorder %v36, %v989
    %vm991 = vcmp.ge.f32.partialorder %v37, %v989
    %v992 = vsel %vm990, %v36, 0.0
    %v993 = vsel %vm991, %v37, 0.0
    %v994 = vsel %vm990, 1.0, 0.0
    %v995 = vsel %vm991, 1.0, 0.0
    %v996 = vadd.f32 %v994, %v995
    %v997 = vrot.slane %v996, 4
    %v998 = vadd.f32 %v996, %v997
    %v999 = vrot.slane %v998, 2
    %v1000 = vadd.f32 %v998, %v999
    %v1001 = vrot.slane %v1000, 1
    %v1002 = vadd.f32 %v1000, %v1001
    %v1003 = vadd.f32 %v992, %v993
    %v1004 = vrot.slane %v1003, 4
    %v1005 = vadd.f32 %v1003, %v1004
    %v1006 = vrot.slane %v1005, 2
    %v1007 = vadd.f32 %v1005, %v1006
    %v1008 = vrot.slane %v1007, 1
    %v1009 = vadd.f32 %v1007, %v1008
    %v1010 = vmul.f32 %v992, %v992
    %v1011 = vmul.f32 %v993, %v993
    %v1012 = vadd.f32 %v1010, %v1011
    %v1013 = vrot.slane %v1012, 4
    %v1014 = vadd.f32 %v1012, %v1013
    %v1015 = vrot.slane %v1014, 2
    %v1016 = vadd.f32 %v1014, %v1015
    %v1017 = vrot.slane %v1016, 1
    %v1018 = vadd.f32 %v1016, %v1017
    %v1019 = vrcp.pop %v1002
    %v1020 = vmul.f32 %v1002, %v1019
    %v1021 = vsub.f32 1.0, %v1020
    %v1022 = vmul.f32 %v1019, %v1021
    %v1023 = vadd.f32 %v1019, %v1022
    %vm1024 = vweird.f32 %v1002
    %vm1025 = vweird.f32 %v1019
    %vm1026 = vmor %vm1024, %vm1025
    %v1027 = vsel %vm1026, %v1019, %v1023
    %v1028 = vand.u32 2147483647, %v1002
    %vm1029 = vcmp.eq.f32.partialorder %v1028, 8.507059e+37
    %v1030 = vand.u32 %v1002, 2147483648
    %v1031 = vor.u32 1.1754944e-38, %v1030
    %v1032 = vsel %vm1029, %v1031, %v1027
    %v1033 = vmul.f32 1.0, %v1032
    %v1034 = vmul.f32 %v1009, %v1033
    %v1035 = vmul.f32 %v1018, %v1033
    %v1036 = vmul.f32 %v1034, %v1034
    %v1037 = vsub.f32 %v1035, %v1036
    %v1038 = vmul.f32 %v1002, %v1037
    %v1039 = vsub.f32 1.0, %v1038
    %v1040 = vmul.f32 %v1039, %v1033
    %v1041 = vmax.f32 %v1040, 0.0
    %v1042 = vrsqrt.pop %v1041
    %v1043 = vmul.f32 %v1042, %v1041
    %v1044 = vmul.f32 %v1043, %v1042
    %v1045 = vmul.f32 0.5, %v1044
    %v1046 = vsub.f32 1.5, %v1045
    %v1047 = vmul.f32 %v1042, %v1046
    %v1048 = vmul.f32 %v1041, %v1047
    %vm1049 = vcmp.eq.f32.partialorder %v1041, inf
    %v1050 = vsel %vm1049, %v1041, %v1048
    %vm1051 = vcmp.eq.f32.partialorder %v1041, 0.0
    %v1052 = vand.u32 %v1041, 2147483648
    %v1053 = vsel %vm1051, %v1052, %v1050
    %v1054 = vsub.f32 %v1034, %v1053
    %vm1055 = vcmp.le.f32.partialorder %v1054, %v37
    %vm1056 = vcmp.gt.f32.partialorder %v1002, %v988
    %v1057 = vsel %vm1056, 1, 0
    %v1058 = vrot.slane %v1057, 7
    %vm1059 = vcmp.ne.s32.totalorder %v1058, 0
    %vm1060 = vmand %vm1055, %vm1059
    %v1062 = vrot.slane %v984, 7
    %v1064 = vsel %vm1060, %v1054, %v1062
    %v1066 = vrot.slane %v988, 7
    %v1068 = vsel %vm1060, %v1002, %v1066
    %v1069 = vperm.slane %v37, 5
    %vm1070 = vcmp.ge.f32.partialorder %v36, %v1069
    %vm1071 = vcmp.ge.f32.partialorder %v37, %v1069
    %v1072 = vsel %vm1070, %v36, 0.0
    %v1073 = vsel %vm1071, %v37, 0.0
    %v1074 = vsel %vm1070, 1.0, 0.0
    %v1075 = vsel %vm1071, 1.0, 0.0
    %v1076 = vadd.f32 %v1074, %v1075
    %v1077 = vrot.slane %v1076, 4
    %v1078 = vadd.f32 %v1076, %v1077
    %v1079 = vrot.slane %v1078, 2
    %v1080 = vadd.f32 %v1078, %v1079
    %v1081 = vrot.slane %v1080, 1
    %v1082 = vadd.f32 %v1080, %v1081
    %v1083 = vadd.f32 %v1072, %v1073
    %v1084 = vrot.slane %v1083, 4
    %v1085 = vadd.f32 %v1083, %v1084
    %v1086 = vrot.slane %v1085, 2
    %v1087 = vadd.f32 %v1085, %v1086
    %v1088 = vrot.slane %v1087, 1
    %v1089 = vadd.f32 %v1087, %v1088
    %v1090 = vmul.f32 %v1072, %v1072
    %v1091 = vmul.f32 %v1073, %v1073
    %v1092 = vadd.f32 %v1090, %v1091
    %v1093 = vrot.slane %v1092, 4
    %v1094 = vadd.f32 %v1092, %v1093
    %v1095 = vrot.slane %v1094, 2
    %v1096 = vadd.f32 %v1094, %v1095
    %v1097 = vrot.slane %v1096, 1
    %v1098 = vadd.f32 %v1096, %v1097
    %v1099 = vrcp.pop %v1082
    %v1100 = vmul.f32 %v1082, %v1099
    %v1101 = vsub.f32 1.0, %v1100
    %v1102 = vmul.f32 %v1099, %v1101
    %v1103 = vadd.f32 %v1099, %v1102
    %vm1104 = vweird.f32 %v1082
    %vm1105 = vweird.f32 %v1099
    %vm1106 = vmor %vm1104, %vm1105
    %v1107 = vsel %vm1106, %v1099, %v1103
    %v1108 = vand.u32 2147483647, %v1082
    %vm1109 = vcmp.eq.f32.partialorder %v1108, 8.507059e+37
    %v1110 = vand.u32 %v1082, 2147483648
    %v1111 = vor.u32 1.1754944e-38, %v1110
    %v1112 = vsel %vm1109, %v1111, %v1107
    %v1113 = vmul.f32 1.0, %v1112
    %v1114 = vmul.f32 %v1089, %v1113
    %v1115 = vmul.f32 %v1098, %v1113
    %v1116 = vmul.f32 %v1114, %v1114
    %v1117 = vsub.f32 %v1115, %v1116
    %v1118 = vmul.f32 %v1082, %v1117
    %v1119 = vsub.f32 1.0, %v1118
    %v1120 = vmul.f32 %v1119, %v1113
    %v1121 = vmax.f32 %v1120, 0.0
    %v1122 = vrsqrt.pop %v1121
    %v1123 = vmul.f32 %v1122, %v1121
    %v1124 = vmul.f32 %v1123, %v1122
    %v1125 = vmul.f32 0.5, %v1124
    %v1126 = vsub.f32 1.5, %v1125
    %v1127 = vmul.f32 %v1122, %v1126
    %v1128 = vmul.f32 %v1121, %v1127
    %vm1129 = vcmp.eq.f32.partialorder %v1121, inf
    %v1130 = vsel %vm1129, %v1121, %v1128
    %vm1131 = vcmp.eq.f32.partialorder %v1121, 0.0
    %v1132 = vand.u32 %v1121, 2147483648
    %v1133 = vsel %vm1131, %v1132, %v1130
    %v1134 = vsub.f32 %v1114, %v1133
    %vm1135 = vcmp.le.f32.partialorder %v1134, %v37
    %vm1136 = vcmp.gt.f32.partialorder %v1082, %v1068
    %v1137 = vsel %vm1136, 1, 0
    %v1138 = vrot.slane %v1137, 7
    %vm1139 = vcmp.ne.s32.totalorder %v1138, 0
    %vm1140 = vmand %vm1135, %vm1139
    %v1142 = vrot.slane %v1064, 7
    %v1144 = vsel %vm1140, %v1134, %v1142
    %v1146 = vrot.slane %v1068, 7
    %v1148 = vsel %vm1140, %v1082, %v1146
    %v1149 = vperm.slane %v37, 6
    %vm1150 = vcmp.ge.f32.partialorder %v36, %v1149
    %vm1151 = vcmp.ge.f32.partialorder %v37, %v1149
    %v1152 = vsel %vm1150, %v36, 0.0
    %v1153 = vsel %vm1151, %v37, 0.0
    %v1154 = vsel %vm1150, 1.0, 0.0
    %v1155 = vsel %vm1151, 1.0, 0.0
    %v1156 = vadd.f32 %v1154, %v1155
    %v1157 = vrot.slane %v1156, 4
    %v1158 = vadd.f32 %v1156, %v1157
    %v1159 = vrot.slane %v1158, 2
    %v1160 = vadd.f32 %v1158, %v1159
    %v1161 = vrot.slane %v1160, 1
    %v1162 = vadd.f32 %v1160, %v1161
    %v1163 = vadd.f32 %v1152, %v1153
    %v1164 = vrot.slane %v1163, 4
    %v1165 = vadd.f32 %v1163, %v1164
    %v1166 = vrot.slane %v1165, 2
    %v1167 = vadd.f32 %v1165, %v1166
    %v1168 = vrot.slane %v1167, 1
    %v1169 = vadd.f32 %v1167, %v1168
    %v1170 = vmul.f32 %v1152, %v1152
    %v1171 = vmul.f32 %v1153, %v1153
    %v1172 = vadd.f32 %v1170, %v1171
    %v1173 = vrot.slane %v1172, 4
    %v1174 = vadd.f32 %v1172, %v1173
    %v1175 = vrot.slane %v1174, 2
    %v1176 = vadd.f32 %v1174, %v1175
    %v1177 = vrot.slane %v1176, 1
    %v1178 = vadd.f32 %v1176, %v1177
    %v1179 = vrcp.pop %v1162
    %v1180 = vmul.f32 %v1162, %v1179
    %v1181 = vsub.f32 1.0, %v1180
    %v1182 = vmul.f32 %v1179, %v1181
    %v1183 = vadd.f32 %v1179, %v1182
    %vm1184 = vweird.f32 %v1162
    %vm1185 = vweird.f32 %v1179
    %vm1186 = vmor %vm1184, %vm1185
    %v1187 = vsel %vm1186, %v1179, %v1183
    %v1188 = vand.u32 2147483647, %v1162
    %vm1189 = vcmp.eq.f32.partialorder %v1188, 8.507059e+37
    %v1190 = vand.u32 %v1162, 2147483648
    %v1191 = vor.u32 1.1754944e-38, %v1190
    %v1192 = vsel %vm1189, %v1191, %v1187
    %v1193 = vmul.f32 1.0, %v1192
    %v1194 = vmul.f32 %v1169, %v1193
    %v1195 = vmul.f32 %v1178, %v1193
    %v1196 = vmul.f32 %v1194, %v1194
    %v1197 = vsub.f32 %v1195, %v1196
    %v1198 = vmul.f32 %v1162, %v1197
    %v1199 = vsub.f32 1.0, %v1198
    %v1200 = vmul.f32 %v1199, %v1193
    %v1201 = vmax.f32 %v1200, 0.0
    %v1202 = vrsqrt.pop %v1201
    %v1203 = vmul.f32 %v1202, %v1201
    %v1204 = vmul.f32 %v1203, %v1202
    %v1205 = vmul.f32 0.5, %v1204
    %v1206 = vsub.f32 1.5, %v1205
    %v1207 = vmul.f32 %v1202, %v1206
    %v1208 = vmul.f32 %v1201, %v1207
    %vm1209 = vcmp.eq.f32.partialorder %v1201, inf
    %v1210 = vsel %vm1209, %v1201, %v1208
    %vm1211 = vcmp.eq.f32.partialorder %v1201, 0.0
    %v1212 = vand.u32 %v1201, 2147483648
    %v1213 = vsel %vm1211, %v1212, %v1210
    %v1214 = vsub.f32 %v1194, %v1213
    %vm1215 = vcmp.le.f32.partialorder %v1214, %v37
    %vm1216 = vcmp.gt.f32.partialorder %v1162, %v1148
    %v1217 = vsel %vm1216, 1, 0
    %v1218 = vrot.slane %v1217, 7
    %vm1219 = vcmp.ne.s32.totalorder %v1218, 0
    %vm1220 = vmand %vm1215, %vm1219
    %v1222 = vrot.slane %v1144, 7
    %v1224 = vsel %vm1220, %v1214, %v1222
    %v1226 = vrot.slane %v1148, 7
    %v1228 = vsel %vm1220, %v1162, %v1226
    %v1229 = vperm.slane %v37, 7
    %vm1230 = vcmp.ge.f32.partialorder %v36, %v1229
    %vm1231 = vcmp.ge.f32.partialorder %v37, %v1229
    %v1232 = vsel %vm1230, %v36, 0.0
    %v1233 = vsel %vm1231, %v37, 0.0
    %v1234 = vsel %vm1230, 1.0, 0.0
    %v1235 = vsel %vm1231, 1.0, 0.0
    %v1236 = vadd.f32 %v1234, %v1235
    %v1237 = vrot.slane %v1236, 4
    %v1238 = vadd.f32 %v1236, %v1237
    %v1239 = vrot.slane %v1238, 2
    %v1240 = vadd.f32 %v1238, %v1239
    %v1241 = vrot.slane %v1240, 1
    %v1242 = vadd.f32 %v1240, %v1241
    %v1243 = vadd.f32 %v1232, %v1233
    %v1244 = vrot.slane %v1243, 4
    %v1245 = vadd.f32 %v1243, %v1244
    %v1246 = vrot.slane %v1245, 2
    %v1247 = vadd.f32 %v1245, %v1246
    %v1248 = vrot.slane %v1247, 1
    %v1249 = vadd.f32 %v1247, %v1248
    %v1250 = vmul.f32 %v1232, %v1232
    %v1251 = vmul.f32 %v1233, %v1233
    %v1252 = vadd.f32 %v1250, %v1251
    %v1253 = vrot.slane %v1252, 4
    %v1254 = vadd.f32 %v1252, %v1253
    %v1255 = vrot.slane %v1254, 2
    %v1256 = vadd.f32 %v1254, %v1255
    %v1257 = vrot.slane %v1256, 1
    %v1258 = vadd.f32 %v1256, %v1257
    %v1259 = vrcp.pop %v1242
    %v1260 = vmul.f32 %v1242, %v1259
    %v1261 = vsub.f32 1.0, %v1260
    %v1262 = vmul.f32 %v1259, %v1261
    %v1263 = vadd.f32 %v1259, %v1262
    %vm1264 = vweird.f32 %v1242
    %vm1265 = vweird.f32 %v1259
    %vm1266 = vmor %vm1264, %vm1265
    %v1267 = vsel %vm1266, %v1259, %v1263
    %v1268 = vand.u32 2147483647, %v1242
    %vm1269 = vcmp.eq.f32.partialorder %v1268, 8.507059e+37
    %v1270 = vand.u32 %v1242, 2147483648
    %v1271 = vor.u32 1.1754944e-38, %v1270
    %v1272 = vsel %vm1269, %v1271, %v1267
    %v1273 = vmul.f32 1.0, %v1272
    %v1274 = vmul.f32 %v1249, %v1273
    %v1275 = vmul.f32 %v1258, %v1273
    %v1276 = vmul.f32 %v1274, %v1274
    %v1277 = vsub.f32 %v1275, %v1276
    %v1278 = vmul.f32 %v1242, %v1277
    %v1279 = vsub.f32 1.0, %v1278
    %v1280 = vmul.f32 %v1279, %v1273
    %v1281 = vmax.f32 %v1280, 0.0
    %v1282 = vrsqrt.pop %v1281
    %v1283 = vmul.f32 %v1282, %v1281
    %v1284 = vmul.f32 %v1283, %v1282
    %v1285 = vmul.f32 0.5, %v1284
    %v1286 = vsub.f32 1.5, %v1285
    %v1287 = vmul.f32 %v1282, %v1286
    %v1288 = vmul.f32 %v1281, %v1287
    %vm1289 = vcmp.eq.f32.partialorder %v1281, inf
    %v1290 = vsel %vm1289, %v1281, %v1288
    %vm1291 = vcmp.eq.f32.partialorder %v1281, 0.0
    %v1292 = vand.u32 %v1281, 2147483648
    %v1293 = vsel %vm1291, %v1292, %v1290
    %v1294 = vsub.f32 %v1274, %v1293
    %vm1295 = vcmp.le.f32.partialorder %v1294, %v37
    %vm1296 = vcmp.gt.f32.partialorder %v1242, %v1228
    %v1297 = vsel %vm1296, 1, 0
    %v1298 = vrot.slane %v1297, 7
    %vm1299 = vcmp.ne.s32.totalorder %v1298, 0
    %vm1300 = vmand %vm1295, %vm1299
    %v1302 = vrot.slane %v1224, 7
    %v1304 = vsel %vm1300, %v1294, %v1302
    %v1305 = vperm.slane %v1304, 7
    %v1306 = vsub.f32 %v36, %v1305
    %v1307 = vsub.f32 %v37, %v1305
    %v1308 = vmax.f32 %v1306, 0.0
    %v1309 = vmax.f32 %v1307, 0.0
    %v1310 = vmul.f32 %v1308, %v1308
    %v1311 = vmul.f32 %v1309, %v1309
    %1312 = vst [vmem:[#allocation5] sm:$0xff] %v1310
    %1313 = vst [vmem:[#allocation5 + $0x8] sm:$0xff] %v1311
    // Predicated region
    $region10: #{tpu_custom_call.1} parent=1 // pred_check
      _
    $region11: #{tpu_custom_call.1} parent=1 // pred_check_branch
      %1315 = sbr.rel (0) target = $region13
    $region12: #{tpu_custom_call.1} parent=1 // pred_region
      %1317 = vsyncadd [#allocation4], 0
      %s1318 = sshll.u32 [#allocation5], 4
      %s1319 = int_to_ptr.vmem [resolvable:$true] %s1318
      %s1320 = sshll.u32 %s1, 4
      %s1321 = int_to_ptr.hbm [resolvable:$true] %s1320
      %1326 = dma.vmem_to_hbm [thread:$0]  %s1319, 256, %s1321, [#allocation4], 128, 128, 8
    $region13: #{tpu_custom_call.1} parent=1 // pred_fallthru
      _
    // Predicated region
    $region14: #{tpu_custom_call.1} parent=1 // pred_check
      _
    $region15: #{tpu_custom_call.1} parent=1 // pred_check_branch
      %1328 = sbr.rel (0) target = $region17
    $region16: #{tpu_custom_call.1} parent=1 // pred_region
      %1330 = dma.done [#allocation4], 256
    $region17: #{tpu_custom_call.1} parent=1 // pred_fallthru
      _
    %1331 = vsyncpa [#allocation3], 1
    %1332 = vsyncpa [#allocation4], 1

</llo_original>
